<compile_context>
chip_gen: v5e
topology: v5e:2x2
jax: 0.10.0
libtpu: 0.0.40
codegen_flags: <defaults>
</compile_context>

<pallas_src>
import jax
import jax.numpy as jnp
from jax.experimental import pallas as pl
from jax.experimental.pallas import tpu as pltpu


# ------------------------------ small helpers ------------------------------

def _round_up(x: int, m: int) -> int:
    return ((x + m - 1) // m) * m


def _dtype_bytes(dtype) -> int:
    return jnp.dtype(dtype).itemsize


def _vmem_budget_bytes() -> int:
    """Per-generation VMEM budget with headroom for compiler temporaries."""
    cap = 64 * 1024 * 1024                    # conservative default (v7x-sized)
    try:
        info = pltpu.get_tpu_info()
        cap = int(getattr(info, "vmem_capacity_bytes", cap))
    except Exception:
        pass
    return min((cap * 3) // 4, 96 * 1024 * 1024)


# ------------------------------ fused kernels ------------------------------

def _make_kernel_resident(num_hidden: int, compute_dtype):
    """Weight-resident path: grid=(nb,).  Whole first layer in one dot."""

    def kernel(*refs):
        x_ref, w1_ref, b1_ref = refs[0], refs[1], refs[2]
        mid = refs[3:3 + 2 * (num_hidden - 1)]
        wh_ref = refs[3 + 2 * (num_hidden - 1)]
        bh_ref = refs[4 + 2 * (num_hidden - 1)]
        out_ref = refs[-1]

        h = jnp.dot(x_ref[...], w1_ref[...], preferred_element_type=jnp.float32)
        h = jnp.maximum(h + b1_ref[...], 0.0)
        for li in range(num_hidden - 1):
            w_ref = mid[2 * li]
            b_ref = mid[2 * li + 1]
            h = jnp.maximum(
                jnp.dot(h.astype(compute_dtype), w_ref[...],
                        preferred_element_type=jnp.float32) + b_ref[...],
                0.0)
        out = (jnp.dot(h.astype(compute_dtype), wh_ref[...],
                       preferred_element_type=jnp.float32) + bh_ref[...])
        out_ref[...] = out.astype(out_ref.dtype)

    return kernel


def _make_kernel_ktiled(num_hidden: int, compute_dtype):
    """K-tiled path: grid=(nb, nk).  First layer accumulated in f32 VMEM."""

    def kernel(*refs):
        x_ref, w1_ref, b1_ref = refs[0], refs[1], refs[2]
        mid = refs[3:3 + 2 * (num_hidden - 1)]
        wh_ref = refs[3 + 2 * (num_hidden - 1)]
        bh_ref = refs[4 + 2 * (num_hidden - 1)]
        out_ref, acc_ref = refs[-2], refs[-1]

        k = pl.program_id(1)

        @pl.when(k == 0)
        def _():
            acc_ref[...] = jnp.zeros_like(acc_ref)

        acc_ref[...] += jnp.dot(x_ref[...], w1_ref[...],
                                preferred_element_type=jnp.float32)

        @pl.when(k == pl.num_programs(1) - 1)
        def _():
            h = jnp.maximum(acc_ref[...] + b1_ref[...], 0.0)
            for li in range(num_hidden - 1):
                w_ref = mid[2 * li]
                b_ref = mid[2 * li + 1]
                h = jnp.maximum(
                    jnp.dot(h.astype(compute_dtype), w_ref[...],
                            preferred_element_type=jnp.float32) + b_ref[...],
                    0.0)
            out = (jnp.dot(h.astype(compute_dtype), wh_ref[...],
                           preferred_element_type=jnp.float32) + bh_ref[...])
            out_ref[...] = out.astype(out_ref.dtype)

    return kernel


# --------------------------- one-time weight prep ---------------------------

def prepare_encoder_params(params, weight_dtype=jnp.float32):
    """Hoisted out of the per-call path: pad the first-layer weight along K to
    a 128 multiple, fuse fc_means/fc_vars into one lane-dense head, and cast
    weights to the storage dtype (biases stay f32)."""
    layers = params["layers"]
    if len(layers) < 1:
        raise ValueError("prepare_encoder_params requires at least one hidden layer")
    weight_dtype = jnp.dtype(weight_dtype)

    w1, b1 = layers[0]
    K, H1 = int(w1.shape[0]), int(w1.shape[1])
    K_pad = _round_up(K, 128)
    w1_p = jnp.zeros((K_pad, H1), weight_dtype).at[:K, :].set(w1.astype(weight_dtype))

    wm, bm = params["fc_means"]
    wv, bv = params["fc_vars"]
    z = int(wm.shape[1])
    H_last = int(wm.shape[0])
    ZP = _round_up(2 * z, 128)
    wh = jnp.concatenate([wm, wv], axis=1)                       # [H_last, 2z]
    bh = jnp.concatenate([bm, bv], axis=1)                       # [1, 2z]
    wh_p = jnp.zeros((H_last, ZP), weight_dtype).at[:, :2 * z].set(wh.astype(weight_dtype))
    bh_p = jnp.zeros((1, ZP), jnp.float32).at[:, :2 * z].set(bh.astype(jnp.float32))

    mids = [(w.astype(weight_dtype), b.astype(jnp.float32)) for (w, b) in layers[1:]]

    return {
        "weight_dtype": weight_dtype,
        "K": K, "K_pad": K_pad, "H1": H1, "z": z, "H_last": H_last, "ZP": ZP,
        "w1_p": w1_p, "b1": b1.astype(jnp.float32),
        "mids": mids, "wh_p": wh_p, "bh_p": bh_p,
    }


def _fits_vmem(TB: int, TK: int, prepped, budget: int) -> bool:
    """Conservative resident-set estimate (double-buffered tiles + f32 epilogue)."""
    wb = _dtype_bytes(prepped["weight_dtype"])
    K_pad, H1, ZP, H_last = (prepped["K_pad"], prepped["H1"],
                             prepped["ZP"], prepped["H_last"])
    tiled = TK < K_pad
    need = 0
    need += 2 * TB * TK * wb                              # x tile (double buffered)
    need += 2 * TK * H1 * wb                              # w1 tile (conservative x2)
    need += 2 * H1 * 4                                    # b1
    for (w, b) in prepped["mids"]:
        need += 2 * (int(w.shape[0]) * int(w.shape[1]) * wb + int(b.shape[1]) * 4)
    need += 2 * (H_last * ZP * wb + ZP * 4)               # fused head
    need += 2 * TB * ZP * 4                               # output tile (double buffered)
    if tiled:
        need += TB * H1 * 4                               # f32 accumulator scratch
    widest = max([H1, ZP] + [int(w.shape[1]) for (w, _) in prepped["mids"]])
    need += 3 * TB * widest * 4                           # f32 epilogue temporaries
    return need <= budget


# ------------------------------ pallas wrapper ------------------------------

def _call_pallas(prepped, x_p, TB, TK, use_buffered, vmem_limit):
    wdt = prepped["weight_dtype"]
    K_pad, H1, ZP, H_last = (prepped["K_pad"], prepped["H1"],
                             prepped["ZP"], prepped["H_last"])
    mids = prepped["mids"]
    n_hidden = 1 + len(mids)
    B_pad = int(x_p.shape[0])
    nb, nk = B_pad // TB, K_pad // TK
    tiled = nk > 1

    def const_spec(shape):
        # Constant-index operand: fetched once; single-buffer when supported.
        if tiled:
            index_map = lambda i, k: (0,) * len(shape)
        else:
            index_map = lambda i: (0,) * len(shape)
        if use_buffered and hasattr(pl, "Buffered"):
            return pl.BlockSpec(shape, index_map, pipeline_mode=pl.Buffered(1))
        return pl.BlockSpec(shape, index_map)

    in_specs = []
    operands = []
    if tiled:
        in_specs.append(pl.BlockSpec((TB, TK), lambda i, k: (i, k)))     # x tile
        in_specs.append(pl.BlockSpec((TK, H1), lambda i, k: (k, 0)))     # w1 K-tile
    else:
        in_specs.append(pl.BlockSpec((TB, K_pad), lambda i: (i, 0)))     # x tile
        in_specs.append(const_spec((K_pad, H1)))                         # w1 resident
    operands += [x_p, prepped["w1_p"]]

    in_specs.append(const_spec((1, H1)))                                 # b1
    operands.append(prepped["b1"])
    for (w, b) in mids:
        in_specs.append(const_spec((int(w.shape[0]), int(w.shape[1]))))
        in_specs.append(const_spec((1, int(b.shape[1]))))
        operands += [w, b]
    in_specs.append(const_spec((H_last, ZP)))                            # fused head W
    in_specs.append(const_spec((1, ZP)))                                 # fused head b
    operands += [prepped["wh_p"], prepped["bh_p"]]

    if tiled:
        out_spec = pl.BlockSpec((TB, ZP), lambda i, k: (i, 0))
        grid = (nb, nk)
        dims = ("parallel", "arbitrary")
        scratch = [pltpu.VMEM((TB, H1), jnp.float32)]
        kernel = _make_kernel_ktiled(n_hidden, wdt)
    else:
        out_spec = pl.BlockSpec((TB, ZP), lambda i: (i, 0))
        grid = (nb,)
        dims = ("parallel",)
        scratch = []
        kernel = _make_kernel_resident(n_hidden, wdt)

    # Advisory cost estimate matching real DMA traffic.
    wb = _dtype_bytes(wdt)
    flops = 2 * B_pad * K_pad * H1
    prev = H1
    for (w, _) in mids:
        flops += 2 * B_pad * prev * int(w.shape[1])
        prev = int(w.shape[1])
    flops += 2 * B_pad * H_last * ZP
    w1_fetches = nb if tiled else 1
    bytes_accessed = (x_p.size * wb + B_pad * ZP * 4
                      + w1_fetches * K_pad * H1 * wb + H1 * 4
                      + sum(int(w.size) * wb + int(b.size) * 4 for (w, b) in mids)
                      + H_last * ZP * wb + ZP * 4)

    return pl.pallas_call(
        kernel,
        out_shape=jax.ShapeDtypeStruct((B_pad, ZP), jnp.float32),
        grid_spec=pltpu.PrefetchScalarGridSpec(
            num_scalar_prefetch=0,
            grid=grid,
            in_specs=in_specs,
            out_specs=out_spec,
            scratch_shapes=scratch,
        ),
        compiler_params=pltpu.CompilerParams(
            dimension_semantics=dims,
            vmem_limit_bytes=int(vmem_limit),
        ),
        cost_estimate=pl.CostEstimate(flops=int(flops), transcendentals=0,
                                      bytes_accessed=int(bytes_accessed)),
    )(*operands)


def encoder_forward(prepped, x, *, max_tk=None):
    """x: [B, C, H, W] (or [B, x_dims]); returns (means, log_vars), each [B, z] f32."""
    wdt = prepped["weight_dtype"]
    K, K_pad, z = prepped["K"], prepped["K_pad"], prepped["z"]

    h0 = x.reshape(x.shape[0], -1)                      # flatten(start_dim=1)
    B = int(h0.shape[0])
    if int(h0.shape[1]) != K:
        raise ValueError(f"expected flattened width {K}, got {h0.shape[1]}")

    budget = _vmem_budget_bytes()

    # Batch tile selection: 256 fills the 256-wide MXU on v6e/v7x; tiny batches
    # use a 16-row sublane-aligned (bf16-pack friendly) tile.
    if B >= 256:
        tb_cands = [256, 128]
    elif B >= 128:
        tb_cands = [128]
    else:
        tb_cands = [_round_up(B, 16)]

    tk_cands = []
    for t in (K_pad, 2048, 1024, 512, 256, 128):
        if t <= K_pad and K_pad % t == 0 and (max_tk is None or t <= max_tk):
            if t not in tk_cands:
                tk_cands.append(t)
    if not tk_cands:
        tk_cands = [128]

    chosen = None
    for TK in tk_cands:                  # prefer weight-resident (largest TK)
        for TB in tb_cands:              # then the largest batch tile that fits
            if _fits_vmem(TB, TK, prepped, budget):
                chosen = (TB, TK)
                break
        if chosen is not None:
            break
    if chosen is None:
        chosen = (tb_cands[-1], tk_cands[-1])
    TB, TK = chosen

    B_pad = _round_up(B, TB)
    # Padded batch rows compute ReLU(0 + b1) through the MLP; sliced off below.
    x_p = jnp.zeros((B_pad, K_pad), wdt).at[:B, :K].set(h0.astype(wdt))

    out = None
    for use_buffered in (True, False):
        try:
            out = _call_pallas(prepped, x_p, TB, TK, use_buffered, budget)
            break
        except Exception:
            if not use_buffered:
                raise
    means = out[:B, :z]
    log_vars = out[:B, z:2 * z]
    return means, log_vars


# Pure-JAX reference for the correctness check.
def encoder_forward_ref(params, x):
    h = x.reshape(x.shape[0], -1).astype(jnp.float32)
    for (w, b) in params["layers"]:
        h = jnp.maximum(h @ w + b, 0.0)
    wm, bm = params["fc_means"]
    wv, bv = params["fc_vars"]
    return h @ wm + bm, h @ wv + bv


# ------------------------------- param init --------------------------------

def init_encoder_params(key, x_dims, z_dims, hidden_dims):
    """Deterministic init.  Weights stored [in, out], bias [1, out], f32."""
    dims = list(hidden_dims)
    dims.insert(0, x_dims)               # mirrors hidden_dims.insert(0, x_dims)
    params = {"layers": []}
    for i in range(len(dims) - 1):
        key, k_w, k_b = jax.random.split(key, 3)
        bound = 1.0 / jnp.sqrt(dims[i])
        w = jax.random.uniform(k_w, (dims[i], dims[i + 1]), jnp.float32, -bound, bound)
        b = jax.random.uniform(k_b, (1, dims[i + 1]), jnp.float32, -bound, bound)
        params["layers"].append((w, b))
    bound = 1.0 / jnp.sqrt(dims[-1])
    key, k1, k2, k3, k4 = jax.random.split(key, 5)
    params["fc_means"] = (
        jax.random.uniform(k1, (dims[-1], z_dims), jnp.float32, -bound, bound),
        jax.random.uniform(k2, (1, z_dims), jnp.float32, -bound, bound),
    )
    params["fc_vars"] = (
        jax.random.uniform(k3, (dims[-1], z_dims), jnp.float32, -bound, bound),
        jax.random.uniform(k4, (1, z_dims), jnp.float32, -bound, bound),
    )
    return params


if __name__ == "__main__":
    key = jax.random.PRNGKey(0)
    k_param, k_x = jax.random.split(key)

    # Small shapes: input [B=2, C=4, H=16, W=16] -> x_dims = 1024
    B, C, H, W = 2, 4, 16, 16
    x_dims = C * H * W
    hidden_dims = [128, 64]
    z_dims = 32

    params = init_encoder_params(k_param, x_dims, z_dims, hidden_dims)
    x = jax.random.normal(k_x, (B, C, H, W), jnp.float32)

    means_ref, log_vars_ref = encoder_forward_ref(params, x)

    # 1) f32 storage, weight-resident (full-K) fast path.
    prepped_f32 = prepare_encoder_params(params, weight_dtype=jnp.float32)
    means, log_vars = encoder_forward(prepped_f32, x)
    means = jax.block_until_ready(means)
    log_vars = jax.block_until_ready(log_vars)
    assert means.shape == (B, z_dims) and log_vars.shape == (B, z_dims)
    assert jnp.allclose(means, means_ref, atol=1e-4, rtol=1e-4)
    assert jnp.allclose(log_vars, log_vars_ref, atol=1e-4, rtol=1e-4)

    # 2) f32 storage, forced K-tiled accumulator path (fallback coverage).
    means_t, log_vars_t = encoder_forward(prepped_f32, x, max_tk=256)
    means_t = jax.block_until_ready(means_t)
    log_vars_t = jax.block_until_ready(log_vars_t)
    assert jnp.allclose(means_t, means_ref, atol=1e-4, rtol=1e-4)
    assert jnp.allclose(log_vars_t, log_vars_ref, atol=1e-4, rtol=1e-4)

    # 3) bf16 weight/activation storage (recommended v6e/v7x configuration).
    prepped_bf16 = prepare_encoder_params(params, weight_dtype=jnp.bfloat16)
    means_b, log_vars_b = encoder_forward(prepped_bf16, x)
    means_b = jax.block_until_ready(means_b)
    log_vars_b = jax.block_until_ready(log_vars_b)
    assert jnp.allclose(means_b, means_ref, atol=7e-2, rtol=7e-2)
    assert jnp.allclose(log_vars_b, log_vars_ref, atol=7e-2, rtol=7e-2)

    print("KERNEL_OK")
</pallas_src>

<mosaic_0001>
module attributes {stable_mosaic.version = 11 : i64} {
  func.func @kernel(%arg0: i32, %arg1: memref<16x1024xf32, #tpu.memory_space<vmem>>, %arg2: memref<1024x128xf32, #tpu.memory_space<vmem>>, %arg3: memref<1x128xf32, #tpu.memory_space<vmem>>, %arg4: memref<128x64xf32, #tpu.memory_space<vmem>>, %arg5: memref<1x64xf32, #tpu.memory_space<vmem>>, %arg6: memref<64x128xf32, #tpu.memory_space<vmem>>, %arg7: memref<1x128xf32, #tpu.memory_space<vmem>>, %arg8: memref<16x128xf32, #tpu.memory_space<vmem>>) attributes {dimension_semantics = [#tpu.dimension_semantics<parallel>], iteration_bounds = array<i64: 1>, scalar_prefetch = 0 : i64, scratch_operands = 0 : i64, tpu.core_type = #tpu.core_type<tc>, window_params = [{transform_indices = @transform_0, window_bounds = array<i64: 16, 1024>}, {pipeline_mode = #tpu.pipeline_mode<synchronous>, transform_indices = @transform_1, window_bounds = array<i64: 1024, 128>}, {pipeline_mode = #tpu.pipeline_mode<synchronous>, transform_indices = @transform_2, window_bounds = array<i64: 1, 128>}, {pipeline_mode = #tpu.pipeline_mode<synchronous>, transform_indices = @transform_3, window_bounds = array<i64: 128, 64>}, {pipeline_mode = #tpu.pipeline_mode<synchronous>, transform_indices = @transform_4, window_bounds = array<i64: 1, 64>}, {pipeline_mode = #tpu.pipeline_mode<synchronous>, transform_indices = @transform_5, window_bounds = array<i64: 64, 128>}, {pipeline_mode = #tpu.pipeline_mode<synchronous>, transform_indices = @transform_6, window_bounds = array<i64: 1, 128>}, {transform_indices = @transform_7, window_bounds = array<i64: 16, 128>}]} {
    %c0 = arith.constant 0 : index
    %c0_0 = arith.constant 0 : index
    %0 = vector.load %arg1[%c0, %c0_0] : memref<16x1024xf32, #tpu.memory_space<vmem>>, vector<16x1024xf32>
    %c0_1 = arith.constant 0 : index
    %c0_2 = arith.constant 0 : index
    %1 = vector.load %arg2[%c0_1, %c0_2] : memref<1024x128xf32, #tpu.memory_space<vmem>>, vector<1024x128xf32>
    %cst = arith.constant dense<0.000000e+00> : vector<16x128xf32>
    %2 = tpu.matmul %0, %1, %cst {dimension_numbers = #tpu.dot_dimension_numbers<[1], [0], [0], [1], [0, 0, 1, 1], [], []>} : vector<16x1024xf32>, vector<1024x128xf32>, vector<16x128xf32> -> vector<16x128xf32>
    %c0_3 = arith.constant 0 : index
    %c0_4 = arith.constant 0 : index
    %3 = vector.load %arg3[%c0_3, %c0_4] : memref<1x128xf32, #tpu.memory_space<vmem>>, vector<1x128xf32>
    %4 = vector.broadcast %3 : vector<1x128xf32> to vector<16x128xf32>
    %5 = arith.addf %2, %4 : vector<16x128xf32>
    %cst_5 = arith.constant 0.000000e+00 : f32
    %6 = vector.broadcast %cst_5 : f32 to vector<16x128xf32>
    %7 = arith.maximumf %5, %6 : vector<16x128xf32>
    %c0_6 = arith.constant 0 : index
    %c0_7 = arith.constant 0 : index
    %8 = vector.load %arg4[%c0_6, %c0_7] : memref<128x64xf32, #tpu.memory_space<vmem>>, vector<128x64xf32>
    %cst_8 = arith.constant dense<0.000000e+00> : vector<16x64xf32>
    %9 = tpu.matmul %7, %8, %cst_8 {dimension_numbers = #tpu.dot_dimension_numbers<[1], [0], [0], [1], [0, 0, 1, 1], [], []>} : vector<16x128xf32>, vector<128x64xf32>, vector<16x64xf32> -> vector<16x64xf32>
    %c0_9 = arith.constant 0 : index
    %c0_10 = arith.constant 0 : index
    %10 = vector.load %arg5[%c0_9, %c0_10] : memref<1x64xf32, #tpu.memory_space<vmem>>, vector<1x64xf32>
    %11 = vector.broadcast %10 : vector<1x64xf32> to vector<16x64xf32>
    %12 = arith.addf %9, %11 : vector<16x64xf32>
    %cst_11 = arith.constant 0.000000e+00 : f32
    %13 = vector.broadcast %cst_11 : f32 to vector<16x64xf32>
    %14 = arith.maximumf %12, %13 : vector<16x64xf32>
    %c0_12 = arith.constant 0 : index
    %c0_13 = arith.constant 0 : index
    %15 = vector.load %arg6[%c0_12, %c0_13] : memref<64x128xf32, #tpu.memory_space<vmem>>, vector<64x128xf32>
    %cst_14 = arith.constant dense<0.000000e+00> : vector<16x128xf32>
    %16 = tpu.matmul %14, %15, %cst_14 {dimension_numbers = #tpu.dot_dimension_numbers<[1], [0], [0], [1], [0, 0, 1, 1], [], []>} : vector<16x64xf32>, vector<64x128xf32>, vector<16x128xf32> -> vector<16x128xf32>
    %c0_15 = arith.constant 0 : index
    %c0_16 = arith.constant 0 : index
    %17 = vector.load %arg7[%c0_15, %c0_16] : memref<1x128xf32, #tpu.memory_space<vmem>>, vector<1x128xf32>
    %18 = vector.broadcast %17 : vector<1x128xf32> to vector<16x128xf32>
    %19 = arith.addf %16, %18 : vector<16x128xf32>
    %c0_17 = arith.constant 0 : index
    %c0_18 = arith.constant 0 : index
    %20 = vector.load %arg8[%c0_17, %c0_18] : memref<16x128xf32, #tpu.memory_space<vmem>>, vector<16x128xf32>
    tpu.vector_store %arg8[%c0_17, %c0_18], %19 {strides = array<i32>} : memref<16x128xf32, #tpu.memory_space<vmem>>, vector<16x128xf32>,
    return
  }
  func.func @transform_0(%arg0: i32) -> (i32, i32) {
    %c0_i32 = arith.constant 0 : i32
    %c0_i32_0 = arith.constant 0 : i32
    return %arg0, %c0_i32 : i32, i32
  }
  func.func @transform_1(%arg0: i32) -> (i32, i32) {
    %c0_i32 = arith.constant 0 : i32
    %c0_i32_0 = arith.constant 0 : i32
    %c0_i32_1 = arith.constant 0 : i32
    return %c0_i32, %c0_i32_0 : i32, i32
  }
  func.func @transform_2(%arg0: i32) -> (i32, i32) {
    %c0_i32 = arith.constant 0 : i32
    %c0_i32_0 = arith.constant 0 : i32
    %c0_i32_1 = arith.constant 0 : i32
    return %c0_i32, %c0_i32_0 : i32, i32
  }
  func.func @transform_3(%arg0: i32) -> (i32, i32) {
    %c0_i32 = arith.constant 0 : i32
    %c0_i32_0 = arith.constant 0 : i32
    %c0_i32_1 = arith.constant 0 : i32
    return %c0_i32, %c0_i32_0 : i32, i32
  }
  func.func @transform_4(%arg0: i32) -> (i32, i32) {
    %c0_i32 = arith.constant 0 : i32
    %c0_i32_0 = arith.constant 0 : i32
    %c0_i32_1 = arith.constant 0 : i32
    return %c0_i32, %c0_i32_0 : i32, i32
  }
  func.func @transform_5(%arg0: i32) -> (i32, i32) {
    %c0_i32 = arith.constant 0 : i32
    %c0_i32_0 = arith.constant 0 : i32
    %c0_i32_1 = arith.constant 0 : i32
    return %c0_i32, %c0_i32_0 : i32, i32
  }
  func.func @transform_6(%arg0: i32) -> (i32, i32) {
    %c0_i32 = arith.constant 0 : i32
    %c0_i32_0 = arith.constant 0 : i32
    %c0_i32_1 = arith.constant 0 : i32
    return %c0_i32, %c0_i32_0 : i32, i32
  }
  func.func @transform_7(%arg0: i32) -> (i32, i32) {
    %c0_i32 = arith.constant 0 : i32
    %c0_i32_0 = arith.constant 0 : i32
    return %arg0, %c0_i32 : i32, i32
  }
}

module attributes {stable_mosaic.version = 11 : i64} {
  func.func @kernel(%arg0: i32, %arg1: memref<16x1024xf32, #tpu.memory_space<vmem>>, %arg2: memref<1024x128xf32, #tpu.memory_space<vmem>>, %arg3: memref<1x128xf32, #tpu.memory_space<vmem>>, %arg4: memref<128x64xf32, #tpu.memory_space<vmem>>, %arg5: memref<1x64xf32, #tpu.memory_space<vmem>>, %arg6: memref<64x128xf32, #tpu.memory_space<vmem>>, %arg7: memref<1x128xf32, #tpu.memory_space<vmem>>, %arg8: memref<16x128xf32, #tpu.memory_space<vmem>>) attributes {dimension_semantics = [#tpu.dimension_semantics<parallel>], iteration_bounds = array<i64: 1>, scalar_prefetch = 0 : i64, scratch_operands = 0 : i64, tpu.core_type = #tpu.core_type<tc>, window_params = [{transform_indices = @transform_0, window_bounds = array<i64: 16, 1024>}, {pipeline_mode = #tpu.pipeline_mode<synchronous>, transform_indices = @transform_1, window_bounds = array<i64: 1024, 128>}, {pipeline_mode = #tpu.pipeline_mode<synchronous>, transform_indices = @transform_2, window_bounds = array<i64: 1, 128>}, {pipeline_mode = #tpu.pipeline_mode<synchronous>, transform_indices = @transform_3, window_bounds = array<i64: 128, 64>}, {pipeline_mode = #tpu.pipeline_mode<synchronous>, transform_indices = @transform_4, window_bounds = array<i64: 1, 64>}, {pipeline_mode = #tpu.pipeline_mode<synchronous>, transform_indices = @transform_5, window_bounds = array<i64: 64, 128>}, {pipeline_mode = #tpu.pipeline_mode<synchronous>, transform_indices = @transform_6, window_bounds = array<i64: 1, 128>}, {transform_indices = @transform_7, window_bounds = array<i64: 16, 128>}]} {
    %c0 = arith.constant 0 : index
    %c0_0 = arith.constant 0 : index
    %0 = vector.load %arg1[%c0, %c0_0] : memref<16x1024xf32, #tpu.memory_space<vmem>>, vector<16x1024xf32>
    %c0_1 = arith.constant 0 : index
    %c0_2 = arith.constant 0 : index
    %1 = vector.load %arg2[%c0_1, %c0_2] : memref<1024x128xf32, #tpu.memory_space<vmem>>, vector<1024x128xf32>
    %cst = arith.constant dense<0.000000e+00> : vector<16x128xf32>
    %2 = tpu.matmul %0, %1, %cst {dimension_numbers = #tpu.dot_dimension_numbers<[1], [0], [0], [1], [0, 0, 1, 1], [], []>} : vector<16x1024xf32>, vector<1024x128xf32>, vector<16x128xf32> -> vector<16x128xf32>
    %c0_3 = arith.constant 0 : index
    %c0_4 = arith.constant 0 : index
    %3 = vector.load %arg3[%c0_3, %c0_4] : memref<1x128xf32, #tpu.memory_space<vmem>>, vector<1x128xf32>
    %4 = vector.broadcast %3 : vector<1x128xf32> to vector<16x128xf32>
    %5 = arith.addf %2, %4 : vector<16x128xf32>
    %cst_5 = arith.constant 0.000000e+00 : f32
    %6 = vector.broadcast %cst_5 : f32 to vector<16x128xf32>
    %7 = arith.maximumf %5, %6 : vector<16x128xf32>
    %c0_6 = arith.constant 0 : index
    %c0_7 = arith.constant 0 : index
    %8 = vector.load %arg4[%c0_6, %c0_7] : memref<128x64xf32, #tpu.memory_space<vmem>>, vector<128x64xf32>
    %cst_8 = arith.constant dense<0.000000e+00> : vector<16x64xf32>
    %9 = tpu.matmul %7, %8, %cst_8 {dimension_numbers = #tpu.dot_dimension_numbers<[1], [0], [0], [1], [0, 0, 1, 1], [], []>} : vector<16x128xf32>, vector<128x64xf32>, vector<16x64xf32> -> vector<16x64xf32>
    %c0_9 = arith.constant 0 : index
    %c0_10 = arith.constant 0 : index
    %10 = vector.load %arg5[%c0_9, %c0_10] : memref<1x64xf32, #tpu.memory_space<vmem>>, vector<1x64xf32>
    %11 = vector.broadcast %10 : vector<1x64xf32> to vector<16x64xf32>
    %12 = arith.addf %9, %11 : vector<16x64xf32>
    %cst_11 = arith.constant 0.000000e+00 : f32
    %13 = vector.broadcast %cst_11 : f32 to vector<16x64xf32>
    %14 = arith.maximumf %12, %13 : vector<16x64xf32>
    %c0_12 = arith.constant 0 : index
    %c0_13 = arith.constant 0 : index
    %15 = vector.load %arg6[%c0_12, %c0_13] : memref<64x128xf32, #tpu.memory_space<vmem>>, vector<64x128xf32>
    %cst_14 = arith.constant dense<0.000000e+00> : vector<16x128xf32>
    %16 = tpu.matmul %14, %15, %cst_14 {dimension_numbers = #tpu.dot_dimension_numbers<[1], [0], [0], [1], [0, 0, 1, 1], [], []>} : vector<16x64xf32>, vector<64x128xf32>, vector<16x128xf32> -> vector<16x128xf32>
    %c0_15 = arith.constant 0 : index
    %c0_16 = arith.constant 0 : index
    %17 = vector.load %arg7[%c0_15, %c0_16] : memref<1x128xf32, #tpu.memory_space<vmem>>, vector<1x128xf32>
    %18 = vector.broadcast %17 : vector<1x128xf32> to vector<16x128xf32>
    %19 = arith.addf %16, %18 : vector<16x128xf32>
    %c0_17 = arith.constant 0 : index
    %c0_18 = arith.constant 0 : index
    %20 = vector.load %arg8[%c0_17, %c0_18] : memref<16x128xf32, #tpu.memory_space<vmem>>, vector<16x128xf32>
    tpu.vector_store %arg8[%c0_17, %c0_18], %19 {strides = array<i32>} : memref<16x128xf32, #tpu.memory_space<vmem>>, vector<16x128xf32>,
    return
  }
  func.func @transform_0(%arg0: i32) -> (i32, i32) {
    %c0_i32 = arith.constant 0 : i32
    %c0_i32_0 = arith.constant 0 : i32
    return %arg0, %c0_i32 : i32, i32
  }
  func.func @transform_1(%arg0: i32) -> (i32, i32) {
    %c0_i32 = arith.constant 0 : i32
    %c0_i32_0 = arith.constant 0 : i32
    %c0_i32_1 = arith.constant 0 : i32
    return %c0_i32, %c0_i32_0 : i32, i32
  }
  func.func @transform_2(%arg0: i32) -> (i32, i32) {
    %c0_i32 = arith.constant 0 : i32
    %c0_i32_0 = arith.constant 0 : i32
    %c0_i32_1 = arith.constant 0 : i32
    return %c0_i32, %c0_i32_0 : i32, i32
  }
  func.func @transform_3(%arg0: i32) -> (i32, i32) {
    %c0_i32 = arith.constant 0 : i32
    %c0_i32_0 = arith.constant 0 : i32
    %c0_i32_1 = arith.constant 0 : i32
    return %c0_i32, %c0_i32_0 : i32, i32
  }
  func.func @transform_4(%arg0: i32) -> (i32, i32) {
    %c0_i32 = arith.constant 0 : i32
    %c0_i32_0 = arith.constant 0 : i32
    %c0_i32_1 = arith.constant 0 : i32
    return %c0_i32, %c0_i32_0 : i32, i32
  }
  func.func @transform_5(%arg0: i32) -> (i32, i32) {
    %c0_i32 = arith.constant 0 : i32
    %c0_i32_0 = arith.constant 0 : i32
    %c0_i32_1 = arith.constant 0 : i32
    return %c0_i32, %c0_i32_0 : i32, i32
  }
  func.func @transform_6(%arg0: i32) -> (i32, i32) {
    %c0_i32 = arith.constant 0 : i32
    %c0_i32_0 = arith.constant 0 : i32
    %c0_i32_1 = arith.constant 0 : i32
    return %c0_i32, %c0_i32_0 : i32, i32
  }
  func.func @transform_7(%arg0: i32) -> (i32, i32) {
    %c0_i32 = arith.constant 0 : i32
    %c0_i32_0 = arith.constant 0 : i32
    return %arg0, %c0_i32 : i32, i32
  }
}

</mosaic_0001>

<llo_original>
// kernel: tpu_custom_call.1
$region0: #{tpu_custom_call.1}
  #allocation0 [shape = 'u32[]', space=smem, size = 0x4, offset = 0x4, fixed_abs, tag = 'smem constant byte address 0x4 - core index']
  #allocation1 [shape = 'u32[72,128]{1,0:T(1,128)}', space=vmem, size = 0x9000, scoped, tag = 'internal scratch']
  %s0 = inlined_call_operand.vmem [shape: f32[16,1024], index: 0, kind: input, shape index: {}]
  %s1 = inlined_call_operand.hbm [shape: f32[1024,128], index: 1, kind: input, shape index: {}]
  %s2 = inlined_call_operand.hbm [shape: f32[1,128], index: 2, kind: input, shape index: {}]
  %s3 = inlined_call_operand.vmem [shape: f32[128,64], index: 3, kind: input, shape index: {}]
  %s4 = inlined_call_operand.vmem [shape: f32[1,64], index: 4, kind: input, shape index: {}]
  %s5 = inlined_call_operand.vmem [shape: f32[64,128], index: 5, kind: input, shape index: {}]
  %s6 = inlined_call_operand.vmem [shape: f32[1,128], index: 6, kind: input, shape index: {}]
  %s7 = inlined_call_operand.hbm [shape: f32[16,128], index: 7, kind: output, shape index: {}]
  %s8 = sld [smem:[#allocation0]]
  $region46: #{tpu_custom_call.1} parent=0
    _
  %s10 = ssub.s32 1, %s8
  %s11 = scalar_select 0, %s10, %s8
  $region1: #{tpu_custom_call.1} parent=0
    #allocation2 [shape = 'u8[524288]{0}', space=vmem, size = 0x80000, scoped, tag = 'input window, operand 1, single buffered']
    #allocation3 [shape = 's32[1]{0}', space=sflag, size = 0x4, scoped, tag = 'scoped memory for tpu_custom_call.1']
    #allocation4 [shape = 's32[1]{0}', space=sflag, size = 0x4, scoped, tag = 'scoped memory for tpu_custom_call.1']
    #allocation5 [shape = 'u8[512]{0}', space=vmem, size = 0x400, scoped, tag = 'input window, operand 2, single buffered']
    #allocation6 [shape = 's32[1]{0}', space=sflag, size = 0x4, scoped, tag = 'scoped memory for tpu_custom_call.1']
    #allocation7 [shape = 'u8[8192]{0}', space=vmem, size = 0x2000, scoped, tag = 'output window, operand 0, single buffered']
    %12 = vsyncpa [#allocation3], 0
    %13 = vsyncpa [#allocation6], 0
    %14 = vsyncpa [#allocation4], 0
    // Predicated region
    $region2: #{tpu_custom_call.1} parent=1 // pred_check
      _
    $region3: #{tpu_custom_call.1} parent=1 // pred_check_branch
      %16 = sbr.rel (0) target = $region5
    $region4: #{tpu_custom_call.1} parent=1 // pred_region
      _
    $region5: #{tpu_custom_call.1} parent=1 // pred_fallthru
      _
    // Predicated region
    $region6: #{tpu_custom_call.1} parent=1 // pred_check
      _
    $region7: #{tpu_custom_call.1} parent=1 // pred_check_branch
      %18 = sbr.rel (0) target = $region9
    $region8: #{tpu_custom_call.1} parent=1 // pred_region
      %20 = vsyncadd [#allocation3], 0
      %s21 = sshll.u32 %s1, 4
      %s22 = int_to_ptr.hbm [resolvable:$true] %s21
      %s23 = sshll.u32 [#allocation2], 4
      %s24 = int_to_ptr.vmem [resolvable:$true] %s23
      %29 = dma.hbm_to_vmem [thread:$0]  %s22, 16384, %s24, [#allocation3], 128, 128, 8
    $region9: #{tpu_custom_call.1} parent=1 // pred_fallthru
      _
    // Predicated region
    $region10: #{tpu_custom_call.1} parent=1 // pred_check
      _
    $region11: #{tpu_custom_call.1} parent=1 // pred_check_branch
      %31 = sbr.rel (0) target = $region13
    $region12: #{tpu_custom_call.1} parent=1 // pred_region
      %33 = vsyncadd [#allocation6], 0
      %s35 = sshll.u32 %s2, 4
      %s36 = int_to_ptr.hbm [resolvable:$true] %s35
      %s37 = sshll.u32 [#allocation5], 4
      %s38 = int_to_ptr.vmem [resolvable:$true] %s37
      %40 = dma.hbm_to_vmem [thread:$0]  %s36, 16, %s38, [#allocation6]
    $region13: #{tpu_custom_call.1} parent=1 // pred_fallthru
      _
    // Predicated region
    $region14: #{tpu_custom_call.1} parent=1 // pred_check
      _
    $region15: #{tpu_custom_call.1} parent=1 // pred_check_branch
      %42 = sbr.rel (0) target = $region17
    $region16: #{tpu_custom_call.1} parent=1 // pred_region
      _
    $region17: #{tpu_custom_call.1} parent=1 // pred_fallthru
      _
    // Predicated region
    $region18: #{tpu_custom_call.1} parent=1 // pred_check
      _
    $region19: #{tpu_custom_call.1} parent=1 // pred_check_branch
      %44 = sbr.rel (0) target = $region21
    $region20: #{tpu_custom_call.1} parent=1 // pred_region
      _
    $region21: #{tpu_custom_call.1} parent=1 // pred_fallthru
      _
    // Predicated region
    $region22: #{tpu_custom_call.1} parent=1 // pred_check
      _
    $region23: #{tpu_custom_call.1} parent=1 // pred_check_branch
      %46 = sbr.rel (0) target = $region25
    $region24: #{tpu_custom_call.1} parent=1 // pred_region
      _
    $region25: #{tpu_custom_call.1} parent=1 // pred_fallthru
      _
    // Predicated region
    $region26: #{tpu_custom_call.1} parent=1 // pred_check
      _
    $region27: #{tpu_custom_call.1} parent=1 // pred_check_branch
      %48 = sbr.rel (0) target = $region29
    $region28: #{tpu_custom_call.1} parent=1 // pred_region
      _
    $region29: #{tpu_custom_call.1} parent=1 // pred_fallthru
      _
    // Predicated region
    $region30: #{tpu_custom_call.1} parent=1 // pred_check
      _
    $region31: #{tpu_custom_call.1} parent=1 // pred_check_branch
      %50 = sbr.rel (0) target = $region33
    $region32: #{tpu_custom_call.1} parent=1 // pred_region
      %52 = dma.done [#allocation3], 16384
    $region33: #{tpu_custom_call.1} parent=1 // pred_fallthru
      _
    // Predicated region
    $region34: #{tpu_custom_call.1} parent=1 // pred_check
      _
    $region35: #{tpu_custom_call.1} parent=1 // pred_check_branch
      %54 = sbr.rel (0) target = $region37
    $region36: #{tpu_custom_call.1} parent=1 // pred_region
      %56 = dma.done [#allocation6], 16
    $region37: #{tpu_custom_call.1} parent=1 // pred_fallthru
      _
    %v57 = vld [vmem:[%s0] sm:$0xff]
    %v58 = vld [vmem:[%s0 + $0x8] sm:$0xff]
    %v59 = vld [vmem:[%s0 + $0x10] sm:$0xff]
    %v60 = vld [vmem:[%s0 + $0x18] sm:$0xff]
    %v61 = vld [vmem:[%s0 + $0x20] sm:$0xff]
    %v62 = vld [vmem:[%s0 + $0x28] sm:$0xff]
    %v63 = vld [vmem:[%s0 + $0x30] sm:$0xff]
    %v64 = vld [vmem:[%s0 + $0x38] sm:$0xff]
    %v65 = vld [vmem:[%s0 + $0x40] sm:$0xff]
    %v66 = vld [vmem:[%s0 + $0x48] sm:$0xff]
    %v67 = vld [vmem:[%s0 + $0x50] sm:$0xff]
    %v68 = vld [vmem:[%s0 + $0x58] sm:$0xff]
    %v69 = vld [vmem:[%s0 + $0x60] sm:$0xff]
    %v70 = vld [vmem:[%s0 + $0x68] sm:$0xff]
    %v71 = vld [vmem:[%s0 + $0x70] sm:$0xff]
    %v72 = vld [vmem:[%s0 + $0x78] sm:$0xff]
    %v73 = vld [vmem:[#allocation2] sm:$0xff]
    %v74 = vld [vmem:[#allocation2 + $0x8] sm:$0xff]
    %v75 = vld [vmem:[#allocation2 + $0x10] sm:$0xff]
    %v76 = vld [vmem:[#allocation2 + $0x18] sm:$0xff]
    %v77 = vld [vmem:[#allocation2 + $0x20] sm:$0xff]
    %v78 = vld [vmem:[#allocation2 + $0x28] sm:$0xff]
    %v79 = vld [vmem:[#allocation2 + $0x30] sm:$0xff]
    %v80 = vld [vmem:[#allocation2 + $0x38] sm:$0xff]
    %v81 = vld [vmem:[#allocation2 + $0x40] sm:$0xff]
    %v82 = vld [vmem:[#allocation2 + $0x48] sm:$0xff]
    %v83 = vld [vmem:[#allocation2 + $0x50] sm:$0xff]
    %v84 = vld [vmem:[#allocation2 + $0x58] sm:$0xff]
    %v85 = vld [vmem:[#allocation2 + $0x60] sm:$0xff]
    %v86 = vld [vmem:[#allocation2 + $0x68] sm:$0xff]
    %v87 = vld [vmem:[#allocation2 + $0x70] sm:$0xff]
    %v88 = vld [vmem:[#allocation2 + $0x78] sm:$0xff]
    %v89 = vld [vmem:[#allocation2 + $0x80] sm:$0xff]
    %v90 = vld [vmem:[#allocation2 + $0x88] sm:$0xff]
    %v91 = vld [vmem:[#allocation2 + $0x90] sm:$0xff]
    %v92 = vld [vmem:[#allocation2 + $0x98] sm:$0xff]
    %v93 = vld [vmem:[#allocation2 + $0xa0] sm:$0xff]
    %v94 = vld [vmem:[#allocation2 + $0xa8] sm:$0xff]
    %v95 = vld [vmem:[#allocation2 + $0xb0] sm:$0xff]
    %v96 = vld [vmem:[#allocation2 + $0xb8] sm:$0xff]
    %v97 = vld [vmem:[#allocation2 + $0xc0] sm:$0xff]
    %v98 = vld [vmem:[#allocation2 + $0xc8] sm:$0xff]
    %v99 = vld [vmem:[#allocation2 + $0xd0] sm:$0xff]
    %v100 = vld [vmem:[#allocation2 + $0xd8] sm:$0xff]
    %v101 = vld [vmem:[#allocation2 + $0xe0] sm:$0xff]
    %v102 = vld [vmem:[#allocation2 + $0xe8] sm:$0xff]
    %v103 = vld [vmem:[#allocation2 + $0xf0] sm:$0xff]
    %v104 = vld [vmem:[#allocation2 + $0xf8] sm:$0xff]
    %v105 = vld [vmem:[#allocation2 + $0x100] sm:$0xff]
    %v106 = vld [vmem:[#allocation2 + $0x108] sm:$0xff]
    %v107 = vld [vmem:[#allocation2 + $0x110] sm:$0xff]
    %v108 = vld [vmem:[#allocation2 + $0x118] sm:$0xff]
    %v109 = vld [vmem:[#allocation2 + $0x120] sm:$0xff]
    %v110 = vld [vmem:[#allocation2 + $0x128] sm:$0xff]
    %v111 = vld [vmem:[#allocation2 + $0x130] sm:$0xff]
    %v112 = vld [vmem:[#allocation2 + $0x138] sm:$0xff]
    %v113 = vld [vmem:[#allocation2 + $0x140] sm:$0xff]
    %v114 = vld [vmem:[#allocation2 + $0x148] sm:$0xff]
    %v115 = vld [vmem:[#allocation2 + $0x150] sm:$0xff]
    %v116 = vld [vmem:[#allocation2 + $0x158] sm:$0xff]
    %v117 = vld [vmem:[#allocation2 + $0x160] sm:$0xff]
    %v118 = vld [vmem:[#allocation2 + $0x168] sm:$0xff]
    %v119 = vld [vmem:[#allocation2 + $0x170] sm:$0xff]
    %v120 = vld [vmem:[#allocation2 + $0x178] sm:$0xff]
    %v121 = vld [vmem:[#allocation2 + $0x180] sm:$0xff]
    %v122 = vld [vmem:[#allocation2 + $0x188] sm:$0xff]
    %v123 = vld [vmem:[#allocation2 + $0x190] sm:$0xff]
    %v124 = vld [vmem:[#allocation2 + $0x198] sm:$0xff]
    %v125 = vld [vmem:[#allocation2 + $0x1a0] sm:$0xff]
    %v126 = vld [vmem:[#allocation2 + $0x1a8] sm:$0xff]
    %v127 = vld [vmem:[#allocation2 + $0x1b0] sm:$0xff]
    %v128 = vld [vmem:[#allocation2 + $0x1b8] sm:$0xff]
    %v129 = vld [vmem:[#allocation2 + $0x1c0] sm:$0xff]
    %v130 = vld [vmem:[#allocation2 + $0x1c8] sm:$0xff]
    %v131 = vld [vmem:[#allocation2 + $0x1d0] sm:$0xff]
    %v132 = vld [vmem:[#allocation2 + $0x1d8] sm:$0xff]
    %v133 = vld [vmem:[#allocation2 + $0x1e0] sm:$0xff]
    %v134 = vld [vmem:[#allocation2 + $0x1e8] sm:$0xff]
    %v135 = vld [vmem:[#allocation2 + $0x1f0] sm:$0xff]
    %v136 = vld [vmem:[#allocation2 + $0x1f8] sm:$0xff]
    %v137 = vld [vmem:[#allocation2 + $0x200] sm:$0xff]
    %v138 = vld [vmem:[#allocation2 + $0x208] sm:$0xff]
    %v139 = vld [vmem:[#allocation2 + $0x210] sm:$0xff]
    %v140 = vld [vmem:[#allocation2 + $0x218] sm:$0xff]
    %v141 = vld [vmem:[#allocation2 + $0x220] sm:$0xff]
    %v142 = vld [vmem:[#allocation2 + $0x228] sm:$0xff]
    %v143 = vld [vmem:[#allocation2 + $0x230] sm:$0xff]
    %v144 = vld [vmem:[#allocation2 + $0x238] sm:$0xff]
    %v145 = vld [vmem:[#allocation2 + $0x240] sm:$0xff]
    %v146 = vld [vmem:[#allocation2 + $0x248] sm:$0xff]
    %v147 = vld [vmem:[#allocation2 + $0x250] sm:$0xff]
    %v148 = vld [vmem:[#allocation2 + $0x258] sm:$0xff]
    %v149 = vld [vmem:[#allocation2 + $0x260] sm:$0xff]
    %v150 = vld [vmem:[#allocation2 + $0x268] sm:$0xff]
    %v151 = vld [vmem:[#allocation2 + $0x270] sm:$0xff]
    %v152 = vld [vmem:[#allocation2 + $0x278] sm:$0xff]
    %v153 = vld [vmem:[#allocation2 + $0x280] sm:$0xff]
    %v154 = vld [vmem:[#allocation2 + $0x288] sm:$0xff]
    %v155 = vld [vmem:[#allocation2 + $0x290] sm:$0xff]
    %v156 = vld [vmem:[#allocation2 + $0x298] sm:$0xff]
    %v157 = vld [vmem:[#allocation2 + $0x2a0] sm:$0xff]
    %v158 = vld [vmem:[#allocation2 + $0x2a8] sm:$0xff]
    %v159 = vld [vmem:[#allocation2 + $0x2b0] sm:$0xff]
    %v160 = vld [vmem:[#allocation2 + $0x2b8] sm:$0xff]
    %v161 = vld [vmem:[#allocation2 + $0x2c0] sm:$0xff]
    %v162 = vld [vmem:[#allocation2 + $0x2c8] sm:$0xff]
    %v163 = vld [vmem:[#allocation2 + $0x2d0] sm:$0xff]
    %v164 = vld [vmem:[#allocation2 + $0x2d8] sm:$0xff]
    %v165 = vld [vmem:[#allocation2 + $0x2e0] sm:$0xff]
    %v166 = vld [vmem:[#allocation2 + $0x2e8] sm:$0xff]
    %v167 = vld [vmem:[#allocation2 + $0x2f0] sm:$0xff]
    %v168 = vld [vmem:[#allocation2 + $0x2f8] sm:$0xff]
    %v169 = vld [vmem:[#allocation2 + $0x300] sm:$0xff]
    %v170 = vld [vmem:[#allocation2 + $0x308] sm:$0xff]
    %v171 = vld [vmem:[#allocation2 + $0x310] sm:$0xff]
    %v172 = vld [vmem:[#allocation2 + $0x318] sm:$0xff]
    %v173 = vld [vmem:[#allocation2 + $0x320] sm:$0xff]
    %v174 = vld [vmem:[#allocation2 + $0x328] sm:$0xff]
    %v175 = vld [vmem:[#allocation2 + $0x330] sm:$0xff]
    %v176 = vld [vmem:[#allocation2 + $0x338] sm:$0xff]
    %v177 = vld [vmem:[#allocation2 + $0x340] sm:$0xff]
    %v178 = vld [vmem:[#allocation2 + $0x348] sm:$0xff]
    %v179 = vld [vmem:[#allocation2 + $0x350] sm:$0xff]
    %v180 = vld [vmem:[#allocation2 + $0x358] sm:$0xff]
    %v181 = vld [vmem:[#allocation2 + $0x360] sm:$0xff]
    %v182 = vld [vmem:[#allocation2 + $0x368] sm:$0xff]
    %v183 = vld [vmem:[#allocation2 + $0x370] sm:$0xff]
    %v184 = vld [vmem:[#allocation2 + $0x378] sm:$0xff]
    %v185 = vld [vmem:[#allocation2 + $0x380] sm:$0xff]
    %v186 = vld [vmem:[#allocation2 + $0x388] sm:$0xff]
    %v187 = vld [vmem:[#allocation2 + $0x390] sm:$0xff]
    %v188 = vld [vmem:[#allocation2 + $0x398] sm:$0xff]
    %v189 = vld [vmem:[#allocation2 + $0x3a0] sm:$0xff]
    %v190 = vld [vmem:[#allocation2 + $0x3a8] sm:$0xff]
    %v191 = vld [vmem:[#allocation2 + $0x3b0] sm:$0xff]
    %v192 = vld [vmem:[#allocation2 + $0x3b8] sm:$0xff]
    %v193 = vld [vmem:[#allocation2 + $0x3c0] sm:$0xff]
    %v194 = vld [vmem:[#allocation2 + $0x3c8] sm:$0xff]
    %v195 = vld [vmem:[#allocation2 + $0x3d0] sm:$0xff]
    %v196 = vld [vmem:[#allocation2 + $0x3d8] sm:$0xff]
    %v197 = vld [vmem:[#allocation2 + $0x3e0] sm:$0xff]
    %v198 = vld [vmem:[#allocation2 + $0x3e8] sm:$0xff]
    %v199 = vld [vmem:[#allocation2 + $0x3f0] sm:$0xff]
    %v200 = vld [vmem:[#allocation2 + $0x3f8] sm:$0xff]
    %v201 = vld [vmem:[#allocation5] sm:$0x1]
    %v203 = vperm.slane %v201, 0
    %205 = vmatpush.msra.mxu0 %v88
    %206 = vmatpush.msra.mxu0 %v87
    %207 = vmatpush.msra.mxu0 %v86
    %208 = vmatpush.msra.mxu0 %v85
    %209 = vmatpush.msra.mxu0 %v84
    %210 = vmatpush.msra.mxu0 %v83
    %211 = vmatpush.msra.mxu0 %v82
    %212 = vmatpush.msra.mxu0 %v81
    %213 = vmatpush.msra.mxu0 %v80
    %214 = vmatpush.msra.mxu0 %v79
    %215 = vmatpush.msra.mxu0 %v78
    %216 = vmatpush.msra.mxu0 %v77
    %217 = vmatpush.msra.mxu0 %v76
    %218 = vmatpush.msra.mxu0 %v75
    %219 = vmatpush.msra.mxu0 %v74
    %220 = vmatpush.msra.mxu0 %v73
    %221 = vmatmul.f32.gmra.mxu0 %v57
    %v222 = vpop.f32.mrf.mxu0
    %v223 = vadd.f32 %v203, %v222
    %224 = vmatmul.f32.gmra.mxu0 %v65
    %v225 = vpop.f32.mrf.mxu0
    %v226 = vadd.f32 %v203, %v225
    %227 = vdwg.mxu0
    %228 = vmatpush.msra.mxu0 %v104
    %229 = vmatpush.msra.mxu0 %v103
    %230 = vmatpush.msra.mxu0 %v102
    %231 = vmatpush.msra.mxu0 %v101
    %232 = vmatpush.msra.mxu0 %v100
    %233 = vmatpush.msra.mxu0 %v99
    %234 = vmatpush.msra.mxu0 %v98
    %235 = vmatpush.msra.mxu0 %v97
    %236 = vmatpush.msra.mxu0 %v96
    %237 = vmatpush.msra.mxu0 %v95
    %238 = vmatpush.msra.mxu0 %v94
    %239 = vmatpush.msra.mxu0 %v93
    %240 = vmatpush.msra.mxu0 %v92
    %241 = vmatpush.msra.mxu0 %v91
    %242 = vmatpush.msra.mxu0 %v90
    %243 = vmatpush.msra.mxu0 %v89
    %244 = vmatmul.f32.gmra.mxu0 %v58
    %v245 = vpop.f32.mrf.mxu0
    %v246 = vadd.f32 %v223, %v245
    %247 = vmatmul.f32.gmra.mxu0 %v66
    %v248 = vpop.f32.mrf.mxu0
    %v249 = vadd.f32 %v226, %v248
    %250 = vdwg.mxu0
    %251 = vmatpush.msra.mxu0 %v120
    %252 = vmatpush.msra.mxu0 %v119
    %253 = vmatpush.msra.mxu0 %v118
    %254 = vmatpush.msra.mxu0 %v117
    %255 = vmatpush.msra.mxu0 %v116
    %256 = vmatpush.msra.mxu0 %v115
    %257 = vmatpush.msra.mxu0 %v114
    %258 = vmatpush.msra.mxu0 %v113
    %259 = vmatpush.msra.mxu0 %v112
    %260 = vmatpush.msra.mxu0 %v111
    %261 = vmatpush.msra.mxu0 %v110
    %262 = vmatpush.msra.mxu0 %v109
    %263 = vmatpush.msra.mxu0 %v108
    %264 = vmatpush.msra.mxu0 %v107
    %265 = vmatpush.msra.mxu0 %v106
    %266 = vmatpush.msra.mxu0 %v105
    %267 = vmatmul.f32.gmra.mxu0 %v59
    %v268 = vpop.f32.mrf.mxu0
    %v269 = vadd.f32 %v246, %v268
    %270 = vmatmul.f32.gmra.mxu0 %v67
    %v271 = vpop.f32.mrf.mxu0
    %v272 = vadd.f32 %v249, %v271
    %273 = vdwg.mxu0
    %274 = vmatpush.msra.mxu0 %v136
    %275 = vmatpush.msra.mxu0 %v135
    %276 = vmatpush.msra.mxu0 %v134
    %277 = vmatpush.msra.mxu0 %v133
    %278 = vmatpush.msra.mxu0 %v132
    %279 = vmatpush.msra.mxu0 %v131
    %280 = vmatpush.msra.mxu0 %v130
    %281 = vmatpush.msra.mxu0 %v129
    %282 = vmatpush.msra.mxu0 %v128
    %283 = vmatpush.msra.mxu0 %v127
    %284 = vmatpush.msra.mxu0 %v126
    %285 = vmatpush.msra.mxu0 %v125
    %286 = vmatpush.msra.mxu0 %v124
    %287 = vmatpush.msra.mxu0 %v123
    %288 = vmatpush.msra.mxu0 %v122
    %289 = vmatpush.msra.mxu0 %v121
    %290 = vmatmul.f32.gmra.mxu0 %v60
    %v291 = vpop.f32.mrf.mxu0
    %v292 = vadd.f32 %v269, %v291
    %293 = vmatmul.f32.gmra.mxu0 %v68
    %v294 = vpop.f32.mrf.mxu0
    %v295 = vadd.f32 %v272, %v294
    %296 = vdwg.mxu0
    %297 = vmatpush.msra.mxu0 %v152
    %298 = vmatpush.msra.mxu0 %v151
    %299 = vmatpush.msra.mxu0 %v150
    %300 = vmatpush.msra.mxu0 %v149
    %301 = vmatpush.msra.mxu0 %v148
    %302 = vmatpush.msra.mxu0 %v147
    %303 = vmatpush.msra.mxu0 %v146
    %304 = vmatpush.msra.mxu0 %v145
    %305 = vmatpush.msra.mxu0 %v144
    %306 = vmatpush.msra.mxu0 %v143
    %307 = vmatpush.msra.mxu0 %v142
    %308 = vmatpush.msra.mxu0 %v141
    %309 = vmatpush.msra.mxu0 %v140
    %310 = vmatpush.msra.mxu0 %v139
    %311 = vmatpush.msra.mxu0 %v138
    %312 = vmatpush.msra.mxu0 %v137
    %313 = vmatmul.f32.gmra.mxu0 %v61
    %v314 = vpop.f32.mrf.mxu0
    %v315 = vadd.f32 %v292, %v314
    %316 = vmatmul.f32.gmra.mxu0 %v69
    %v317 = vpop.f32.mrf.mxu0
    %v318 = vadd.f32 %v295, %v317
    %319 = vdwg.mxu0
    %320 = vmatpush.msra.mxu0 %v168
    %321 = vmatpush.msra.mxu0 %v167
    %322 = vmatpush.msra.mxu0 %v166
    %323 = vmatpush.msra.mxu0 %v165
    %324 = vmatpush.msra.mxu0 %v164
    %325 = vmatpush.msra.mxu0 %v163
    %326 = vmatpush.msra.mxu0 %v162
    %327 = vmatpush.msra.mxu0 %v161
    %328 = vmatpush.msra.mxu0 %v160
    %329 = vmatpush.msra.mxu0 %v159
    %330 = vmatpush.msra.mxu0 %v158
    %331 = vmatpush.msra.mxu0 %v157
    %332 = vmatpush.msra.mxu0 %v156
    %333 = vmatpush.msra.mxu0 %v155
    %334 = vmatpush.msra.mxu0 %v154
    %335 = vmatpush.msra.mxu0 %v153
    %336 = vmatmul.f32.gmra.mxu0 %v62
    %v337 = vpop.f32.mrf.mxu0
    %v338 = vadd.f32 %v315, %v337
    %339 = vmatmul.f32.gmra.mxu0 %v70
    %v340 = vpop.f32.mrf.mxu0
    %v341 = vadd.f32 %v318, %v340
    %342 = vdwg.mxu0
    %343 = vmatpush.msra.mxu0 %v184
    %344 = vmatpush.msra.mxu0 %v183
    %345 = vmatpush.msra.mxu0 %v182
    %346 = vmatpush.msra.mxu0 %v181
    %347 = vmatpush.msra.mxu0 %v180
    %348 = vmatpush.msra.mxu0 %v179
    %349 = vmatpush.msra.mxu0 %v178
    %350 = vmatpush.msra.mxu0 %v177
    %351 = vmatpush.msra.mxu0 %v176
    %352 = vmatpush.msra.mxu0 %v175
    %353 = vmatpush.msra.mxu0 %v174
    %354 = vmatpush.msra.mxu0 %v173
    %355 = vmatpush.msra.mxu0 %v172
    %356 = vmatpush.msra.mxu0 %v171
    %357 = vmatpush.msra.mxu0 %v170
    %358 = vmatpush.msra.mxu0 %v169
    %359 = vmatmul.f32.gmra.mxu0 %v63
    %v360 = vpop.f32.mrf.mxu0
    %v361 = vadd.f32 %v338, %v360
    %362 = vmatmul.f32.gmra.mxu0 %v71
    %v363 = vpop.f32.mrf.mxu0
    %v364 = vadd.f32 %v341, %v363
    %365 = vdwg.mxu0
    %366 = vmatpush.msra.mxu0 %v200
    %367 = vmatpush.msra.mxu0 %v199
    %368 = vmatpush.msra.mxu0 %v198
    %369 = vmatpush.msra.mxu0 %v197
    %370 = vmatpush.msra.mxu0 %v196
    %371 = vmatpush.msra.mxu0 %v195
    %372 = vmatpush.msra.mxu0 %v194
    %373 = vmatpush.msra.mxu0 %v193
    %374 = vmatpush.msra.mxu0 %v192
    %375 = vmatpush.msra.mxu0 %v191
    %376 = vmatpush.msra.mxu0 %v190
    %377 = vmatpush.msra.mxu0 %v189
    %378 = vmatpush.msra.mxu0 %v188
    %379 = vmatpush.msra.mxu0 %v187
    %380 = vmatpush.msra.mxu0 %v186
    %381 = vmatpush.msra.mxu0 %v185
    %382 = vmatmul.f32.gmra.mxu0 %v64
    %v383 = vpop.f32.mrf.mxu0
    %v384 = vadd.f32 %v361, %v383
    %385 = vmatmul.f32.gmra.mxu0 %v72
    %v386 = vpop.f32.mrf.mxu0
    %v387 = vadd.f32 %v364, %v386
    %388 = vdwg.mxu0
    %v389 = vmax.f32 %v384, 0.0
    %v390 = vmax.f32 %v387, 0.0
    %v391 = vld [vmem:[%s3] sm:$0xff]
    %v392 = vld [vmem:[%s3 + $0x8] sm:$0xff]
    %v393 = vld [vmem:[%s3 + $0x10] sm:$0xff]
    %v394 = vld [vmem:[%s3 + $0x18] sm:$0xff]
    %v395 = vld [vmem:[%s3 + $0x20] sm:$0xff]
    %v396 = vld [vmem:[%s3 + $0x28] sm:$0xff]
    %v397 = vld [vmem:[%s3 + $0x30] sm:$0xff]
    %v398 = vld [vmem:[%s3 + $0x38] sm:$0xff]
    %v399 = vld [vmem:[%s3 + $0x40] sm:$0xff]
    %v400 = vld [vmem:[%s3 + $0x48] sm:$0xff]
    %v401 = vld [vmem:[%s3 + $0x50] sm:$0xff]
    %v402 = vld [vmem:[%s3 + $0x58] sm:$0xff]
    %v403 = vld [vmem:[%s3 + $0x60] sm:$0xff]
    %v404 = vld [vmem:[%s3 + $0x68] sm:$0xff]
    %v405 = vld [vmem:[%s3 + $0x70] sm:$0xff]
    %v406 = vld [vmem:[%s3 + $0x78] sm:$0xff]
    %v407 = vld [vmem:[%s4] sm:$0x1]
    %v409 = vperm.slane %v407, 0
    %411 = vmatpush.msra.mxu0 %v406
    %412 = vmatpush.msra.mxu0 %v405
    %413 = vmatpush.msra.mxu0 %v404
    %414 = vmatpush.msra.mxu0 %v403
    %415 = vmatpush.msra.mxu0 %v402
    %416 = vmatpush.msra.mxu0 %v401
    %417 = vmatpush.msra.mxu0 %v400
    %418 = vmatpush.msra.mxu0 %v399
    %419 = vmatpush.msra.mxu0 %v398
    %420 = vmatpush.msra.mxu0 %v397
    %421 = vmatpush.msra.mxu0 %v396
    %422 = vmatpush.msra.mxu0 %v395
    %423 = vmatpush.msra.mxu0 %v394
    %424 = vmatpush.msra.mxu0 %v393
    %425 = vmatpush.msra.mxu0 %v392
    %426 = vmatpush.msra.mxu0 %v391
    %427 = vmatmul.f32.gmra.mxu0 %v389
    %v428 = vpop.f32.mrf.mxu0
    %v429 = vadd.f32 %v409, %v428
    %430 = vmatmul.f32.gmra.mxu0 %v390
    %v431 = vpop.f32.mrf.mxu0
    %v432 = vadd.f32 %v409, %v431
    %433 = vdwg.mxu0
    %v434 = vmax.f32 %v429, 0.0
    %v435 = vmax.f32 %v432, 0.0
    %v436 = vld [vmem:[%s5] sm:$0xff]
    %v437 = vld [vmem:[%s5 + $0x8] sm:$0xff]
    %v438 = vld [vmem:[%s5 + $0x10] sm:$0xff]
    %v439 = vld [vmem:[%s5 + $0x18] sm:$0xff]
    %v440 = vld [vmem:[%s5 + $0x20] sm:$0xff]
    %v441 = vld [vmem:[%s5 + $0x28] sm:$0xff]
    %v442 = vld [vmem:[%s5 + $0x30] sm:$0xff]
    %v443 = vld [vmem:[%s5 + $0x38] sm:$0xff]
    %v444 = vld [vmem:[%s6] sm:$0x1]
    %v446 = vperm.slane %v444, 0
    %vm448 = vcmask 523264
    %v450 = vsel %vm448, %v434, 0
    %v453 = vsel %vm448, %v435, 0
    %455 = vmatpush.msra.mxu0 0.0
    %456 = vmatpush.msra.mxu0 0.0
    %457 = vmatpush.msra.mxu0 0.0
    %458 = vmatpush.msra.mxu0 0.0
    %459 = vmatpush.msra.mxu0 0.0
    %460 = vmatpush.msra.mxu0 0.0
    %461 = vmatpush.msra.mxu0 0.0
    %462 = vmatpush.msra.mxu0 0.0
    %463 = vmatpush.msra.mxu0 %v443
    %464 = vmatpush.msra.mxu0 %v442
    %465 = vmatpush.msra.mxu0 %v441
    %466 = vmatpush.msra.mxu0 %v440
    %467 = vmatpush.msra.mxu0 %v439
    %468 = vmatpush.msra.mxu0 %v438
    %469 = vmatpush.msra.mxu0 %v437
    %470 = vmatpush.msra.mxu0 %v436
    %471 = vmatmul.f32.gmra.mxu0 %v450
    %v472 = vpop.f32.mrf.mxu0
    %v473 = vadd.f32 %v446, %v472
    %474 = vmatmul.f32.gmra.mxu0 %v453
    %v475 = vpop.f32.mrf.mxu0
    %v476 = vadd.f32 %v446, %v475
    %477 = vdwg.mxu0
    %478 = vst [vmem:[#allocation7] sm:$0xff] %v473
    %479 = vst [vmem:[#allocation7 + $0x8] sm:$0xff] %v476
    // Predicated region
    $region38: #{tpu_custom_call.1} parent=1 // pred_check
      _
    $region39: #{tpu_custom_call.1} parent=1 // pred_check_branch
      %481 = sbr.rel (0) target = $region41
    $region40: #{tpu_custom_call.1} parent=1 // pred_region
      %483 = vsyncadd [#allocation4], 0
      %s484 = sshll.u32 [#allocation7], 4
      %s485 = int_to_ptr.vmem [resolvable:$true] %s484
      %s486 = sshll.u32 %s7, 4
      %s487 = int_to_ptr.hbm [resolvable:$true] %s486
      %492 = dma.vmem_to_hbm [thread:$0]  %s485, 256, %s487, [#allocation4], 128, 128, 8
    $region41: #{tpu_custom_call.1} parent=1 // pred_fallthru
      _
    // Predicated region
    $region42: #{tpu_custom_call.1} parent=1 // pred_check
      _
    $region43: #{tpu_custom_call.1} parent=1 // pred_check_branch
      %494 = sbr.rel (0) target = $region45
    $region44: #{tpu_custom_call.1} parent=1 // pred_region
      %496 = dma.done [#allocation4], 256
    $region45: #{tpu_custom_call.1} parent=1 // pred_fallthru
      _
    %497 = vsyncpa [#allocation3], 1
    %498 = vsyncpa [#allocation6], 1
    %499 = vsyncpa [#allocation4], 1

// kernel: tpu_custom_call.1
$region0: #{tpu_custom_call.1}
  #allocation0 [shape = 'u32[]', space=smem, size = 0x4, offset = 0x4, fixed_abs, tag = 'smem constant byte address 0x4 - core index']
  #allocation1 [shape = 'u32[72,128]{1,0:T(1,128)}', space=vmem, size = 0x9000, scoped, tag = 'internal scratch']
  %s0 = inlined_call_operand.vmem [shape: f32[16,1024], index: 0, kind: input, shape index: {}]
  %s1 = inlined_call_operand.hbm [shape: f32[1024,128], index: 1, kind: input, shape index: {}]
  %s2 = inlined_call_operand.hbm [shape: f32[1,128], index: 2, kind: input, shape index: {}]
  %s3 = inlined_call_operand.vmem [shape: f32[128,64], index: 3, kind: input, shape index: {}]
  %s4 = inlined_call_operand.vmem [shape: f32[1,64], index: 4, kind: input, shape index: {}]
  %s5 = inlined_call_operand.vmem [shape: f32[64,128], index: 5, kind: input, shape index: {}]
  %s6 = inlined_call_operand.vmem [shape: f32[1,128], index: 6, kind: input, shape index: {}]
  %s7 = inlined_call_operand.hbm [shape: f32[16,128], index: 7, kind: output, shape index: {}]
  %s8 = sld [smem:[#allocation0]]
  $region46: #{tpu_custom_call.1} parent=0
    _
  %s10 = ssub.s32 1, %s8
  %s11 = scalar_select 0, %s10, %s8
  $region1: #{tpu_custom_call.1} parent=0
    #allocation2 [shape = 'u8[524288]{0}', space=vmem, size = 0x80000, scoped, tag = 'input window, operand 1, single buffered']
    #allocation3 [shape = 's32[1]{0}', space=sflag, size = 0x4, scoped, tag = 'scoped memory for tpu_custom_call.1']
    #allocation4 [shape = 's32[1]{0}', space=sflag, size = 0x4, scoped, tag = 'scoped memory for tpu_custom_call.1']
    #allocation5 [shape = 'u8[512]{0}', space=vmem, size = 0x400, scoped, tag = 'input window, operand 2, single buffered']
    #allocation6 [shape = 's32[1]{0}', space=sflag, size = 0x4, scoped, tag = 'scoped memory for tpu_custom_call.1']
    #allocation7 [shape = 'u8[8192]{0}', space=vmem, size = 0x2000, scoped, tag = 'output window, operand 0, single buffered']
    %12 = vsyncpa [#allocation3], 0
    %13 = vsyncpa [#allocation6], 0
    %14 = vsyncpa [#allocation4], 0
    // Predicated region
    $region2: #{tpu_custom_call.1} parent=1 // pred_check
      _
    $region3: #{tpu_custom_call.1} parent=1 // pred_check_branch
      %16 = sbr.rel (0) target = $region5
    $region4: #{tpu_custom_call.1} parent=1 // pred_region
      _
    $region5: #{tpu_custom_call.1} parent=1 // pred_fallthru
      _
    // Predicated region
    $region6: #{tpu_custom_call.1} parent=1 // pred_check
      _
    $region7: #{tpu_custom_call.1} parent=1 // pred_check_branch
      %18 = sbr.rel (0) target = $region9
    $region8: #{tpu_custom_call.1} parent=1 // pred_region
      %20 = vsyncadd [#allocation3], 0
      %s21 = sshll.u32 %s1, 4
      %s22 = int_to_ptr.hbm [resolvable:$true] %s21
      %s23 = sshll.u32 [#allocation2], 4
      %s24 = int_to_ptr.vmem [resolvable:$true] %s23
      %29 = dma.hbm_to_vmem [thread:$0]  %s22, 16384, %s24, [#allocation3], 128, 128, 8
    $region9: #{tpu_custom_call.1} parent=1 // pred_fallthru
      _
    // Predicated region
    $region10: #{tpu_custom_call.1} parent=1 // pred_check
      _
    $region11: #{tpu_custom_call.1} parent=1 // pred_check_branch
      %31 = sbr.rel (0) target = $region13
    $region12: #{tpu_custom_call.1} parent=1 // pred_region
      %33 = vsyncadd [#allocation6], 0
      %s35 = sshll.u32 %s2, 4
      %s36 = int_to_ptr.hbm [resolvable:$true] %s35
      %s37 = sshll.u32 [#allocation5], 4
      %s38 = int_to_ptr.vmem [resolvable:$true] %s37
      %40 = dma.hbm_to_vmem [thread:$0]  %s36, 16, %s38, [#allocation6]
    $region13: #{tpu_custom_call.1} parent=1 // pred_fallthru
      _
    // Predicated region
    $region14: #{tpu_custom_call.1} parent=1 // pred_check
      _
    $region15: #{tpu_custom_call.1} parent=1 // pred_check_branch
      %42 = sbr.rel (0) target = $region17
    $region16: #{tpu_custom_call.1} parent=1 // pred_region
      _
    $region17: #{tpu_custom_call.1} parent=1 // pred_fallthru
      _
    // Predicated region
    $region18: #{tpu_custom_call.1} parent=1 // pred_check
      _
    $region19: #{tpu_custom_call.1} parent=1 // pred_check_branch
      %44 = sbr.rel (0) target = $region21
    $region20: #{tpu_custom_call.1} parent=1 // pred_region
      _
    $region21: #{tpu_custom_call.1} parent=1 // pred_fallthru
      _
    // Predicated region
    $region22: #{tpu_custom_call.1} parent=1 // pred_check
      _
    $region23: #{tpu_custom_call.1} parent=1 // pred_check_branch
      %46 = sbr.rel (0) target = $region25
    $region24: #{tpu_custom_call.1} parent=1 // pred_region
      _
    $region25: #{tpu_custom_call.1} parent=1 // pred_fallthru
      _
    // Predicated region
    $region26: #{tpu_custom_call.1} parent=1 // pred_check
      _
    $region27: #{tpu_custom_call.1} parent=1 // pred_check_branch
      %48 = sbr.rel (0) target = $region29
    $region28: #{tpu_custom_call.1} parent=1 // pred_region
      _
    $region29: #{tpu_custom_call.1} parent=1 // pred_fallthru
      _
    // Predicated region
    $region30: #{tpu_custom_call.1} parent=1 // pred_check
      _
    $region31: #{tpu_custom_call.1} parent=1 // pred_check_branch
      %50 = sbr.rel (0) target = $region33
    $region32: #{tpu_custom_call.1} parent=1 // pred_region
      %52 = dma.done [#allocation3], 16384
    $region33: #{tpu_custom_call.1} parent=1 // pred_fallthru
      _
    // Predicated region
    $region34: #{tpu_custom_call.1} parent=1 // pred_check
      _
    $region35: #{tpu_custom_call.1} parent=1 // pred_check_branch
      %54 = sbr.rel (0) target = $region37
    $region36: #{tpu_custom_call.1} parent=1 // pred_region
      %56 = dma.done [#allocation6], 16
    $region37: #{tpu_custom_call.1} parent=1 // pred_fallthru
      _
    %v57 = vld [vmem:[%s0] sm:$0xff]
    %v58 = vld [vmem:[%s0 + $0x8] sm:$0xff]
    %v59 = vld [vmem:[%s0 + $0x10] sm:$0xff]
    %v60 = vld [vmem:[%s0 + $0x18] sm:$0xff]
    %v61 = vld [vmem:[%s0 + $0x20] sm:$0xff]
    %v62 = vld [vmem:[%s0 + $0x28] sm:$0xff]
    %v63 = vld [vmem:[%s0 + $0x30] sm:$0xff]
    %v64 = vld [vmem:[%s0 + $0x38] sm:$0xff]
    %v65 = vld [vmem:[%s0 + $0x40] sm:$0xff]
    %v66 = vld [vmem:[%s0 + $0x48] sm:$0xff]
    %v67 = vld [vmem:[%s0 + $0x50] sm:$0xff]
    %v68 = vld [vmem:[%s0 + $0x58] sm:$0xff]
    %v69 = vld [vmem:[%s0 + $0x60] sm:$0xff]
    %v70 = vld [vmem:[%s0 + $0x68] sm:$0xff]
    %v71 = vld [vmem:[%s0 + $0x70] sm:$0xff]
    %v72 = vld [vmem:[%s0 + $0x78] sm:$0xff]
    %v73 = vld [vmem:[#allocation2] sm:$0xff]
    %v74 = vld [vmem:[#allocation2 + $0x8] sm:$0xff]
    %v75 = vld [vmem:[#allocation2 + $0x10] sm:$0xff]
    %v76 = vld [vmem:[#allocation2 + $0x18] sm:$0xff]
    %v77 = vld [vmem:[#allocation2 + $0x20] sm:$0xff]
    %v78 = vld [vmem:[#allocation2 + $0x28] sm:$0xff]
    %v79 = vld [vmem:[#allocation2 + $0x30] sm:$0xff]
    %v80 = vld [vmem:[#allocation2 + $0x38] sm:$0xff]
    %v81 = vld [vmem:[#allocation2 + $0x40] sm:$0xff]
    %v82 = vld [vmem:[#allocation2 + $0x48] sm:$0xff]
    %v83 = vld [vmem:[#allocation2 + $0x50] sm:$0xff]
    %v84 = vld [vmem:[#allocation2 + $0x58] sm:$0xff]
    %v85 = vld [vmem:[#allocation2 + $0x60] sm:$0xff]
    %v86 = vld [vmem:[#allocation2 + $0x68] sm:$0xff]
    %v87 = vld [vmem:[#allocation2 + $0x70] sm:$0xff]
    %v88 = vld [vmem:[#allocation2 + $0x78] sm:$0xff]
    %v89 = vld [vmem:[#allocation2 + $0x80] sm:$0xff]
    %v90 = vld [vmem:[#allocation2 + $0x88] sm:$0xff]
    %v91 = vld [vmem:[#allocation2 + $0x90] sm:$0xff]
    %v92 = vld [vmem:[#allocation2 + $0x98] sm:$0xff]
    %v93 = vld [vmem:[#allocation2 + $0xa0] sm:$0xff]
    %v94 = vld [vmem:[#allocation2 + $0xa8] sm:$0xff]
    %v95 = vld [vmem:[#allocation2 + $0xb0] sm:$0xff]
    %v96 = vld [vmem:[#allocation2 + $0xb8] sm:$0xff]
    %v97 = vld [vmem:[#allocation2 + $0xc0] sm:$0xff]
    %v98 = vld [vmem:[#allocation2 + $0xc8] sm:$0xff]
    %v99 = vld [vmem:[#allocation2 + $0xd0] sm:$0xff]
    %v100 = vld [vmem:[#allocation2 + $0xd8] sm:$0xff]
    %v101 = vld [vmem:[#allocation2 + $0xe0] sm:$0xff]
    %v102 = vld [vmem:[#allocation2 + $0xe8] sm:$0xff]
    %v103 = vld [vmem:[#allocation2 + $0xf0] sm:$0xff]
    %v104 = vld [vmem:[#allocation2 + $0xf8] sm:$0xff]
    %v105 = vld [vmem:[#allocation2 + $0x100] sm:$0xff]
    %v106 = vld [vmem:[#allocation2 + $0x108] sm:$0xff]
    %v107 = vld [vmem:[#allocation2 + $0x110] sm:$0xff]
    %v108 = vld [vmem:[#allocation2 + $0x118] sm:$0xff]
    %v109 = vld [vmem:[#allocation2 + $0x120] sm:$0xff]
    %v110 = vld [vmem:[#allocation2 + $0x128] sm:$0xff]
    %v111 = vld [vmem:[#allocation2 + $0x130] sm:$0xff]
    %v112 = vld [vmem:[#allocation2 + $0x138] sm:$0xff]
    %v113 = vld [vmem:[#allocation2 + $0x140] sm:$0xff]
    %v114 = vld [vmem:[#allocation2 + $0x148] sm:$0xff]
    %v115 = vld [vmem:[#allocation2 + $0x150] sm:$0xff]
    %v116 = vld [vmem:[#allocation2 + $0x158] sm:$0xff]
    %v117 = vld [vmem:[#allocation2 + $0x160] sm:$0xff]
    %v118 = vld [vmem:[#allocation2 + $0x168] sm:$0xff]
    %v119 = vld [vmem:[#allocation2 + $0x170] sm:$0xff]
    %v120 = vld [vmem:[#allocation2 + $0x178] sm:$0xff]
    %v121 = vld [vmem:[#allocation2 + $0x180] sm:$0xff]
    %v122 = vld [vmem:[#allocation2 + $0x188] sm:$0xff]
    %v123 = vld [vmem:[#allocation2 + $0x190] sm:$0xff]
    %v124 = vld [vmem:[#allocation2 + $0x198] sm:$0xff]
    %v125 = vld [vmem:[#allocation2 + $0x1a0] sm:$0xff]
    %v126 = vld [vmem:[#allocation2 + $0x1a8] sm:$0xff]
    %v127 = vld [vmem:[#allocation2 + $0x1b0] sm:$0xff]
    %v128 = vld [vmem:[#allocation2 + $0x1b8] sm:$0xff]
    %v129 = vld [vmem:[#allocation2 + $0x1c0] sm:$0xff]
    %v130 = vld [vmem:[#allocation2 + $0x1c8] sm:$0xff]
    %v131 = vld [vmem:[#allocation2 + $0x1d0] sm:$0xff]
    %v132 = vld [vmem:[#allocation2 + $0x1d8] sm:$0xff]
    %v133 = vld [vmem:[#allocation2 + $0x1e0] sm:$0xff]
    %v134 = vld [vmem:[#allocation2 + $0x1e8] sm:$0xff]
    %v135 = vld [vmem:[#allocation2 + $0x1f0] sm:$0xff]
    %v136 = vld [vmem:[#allocation2 + $0x1f8] sm:$0xff]
    %v137 = vld [vmem:[#allocation2 + $0x200] sm:$0xff]
    %v138 = vld [vmem:[#allocation2 + $0x208] sm:$0xff]
    %v139 = vld [vmem:[#allocation2 + $0x210] sm:$0xff]
    %v140 = vld [vmem:[#allocation2 + $0x218] sm:$0xff]
    %v141 = vld [vmem:[#allocation2 + $0x220] sm:$0xff]
    %v142 = vld [vmem:[#allocation2 + $0x228] sm:$0xff]
    %v143 = vld [vmem:[#allocation2 + $0x230] sm:$0xff]
    %v144 = vld [vmem:[#allocation2 + $0x238] sm:$0xff]
    %v145 = vld [vmem:[#allocation2 + $0x240] sm:$0xff]
    %v146 = vld [vmem:[#allocation2 + $0x248] sm:$0xff]
    %v147 = vld [vmem:[#allocation2 + $0x250] sm:$0xff]
    %v148 = vld [vmem:[#allocation2 + $0x258] sm:$0xff]
    %v149 = vld [vmem:[#allocation2 + $0x260] sm:$0xff]
    %v150 = vld [vmem:[#allocation2 + $0x268] sm:$0xff]
    %v151 = vld [vmem:[#allocation2 + $0x270] sm:$0xff]
    %v152 = vld [vmem:[#allocation2 + $0x278] sm:$0xff]
    %v153 = vld [vmem:[#allocation2 + $0x280] sm:$0xff]
    %v154 = vld [vmem:[#allocation2 + $0x288] sm:$0xff]
    %v155 = vld [vmem:[#allocation2 + $0x290] sm:$0xff]
    %v156 = vld [vmem:[#allocation2 + $0x298] sm:$0xff]
    %v157 = vld [vmem:[#allocation2 + $0x2a0] sm:$0xff]
    %v158 = vld [vmem:[#allocation2 + $0x2a8] sm:$0xff]
    %v159 = vld [vmem:[#allocation2 + $0x2b0] sm:$0xff]
    %v160 = vld [vmem:[#allocation2 + $0x2b8] sm:$0xff]
    %v161 = vld [vmem:[#allocation2 + $0x2c0] sm:$0xff]
    %v162 = vld [vmem:[#allocation2 + $0x2c8] sm:$0xff]
    %v163 = vld [vmem:[#allocation2 + $0x2d0] sm:$0xff]
    %v164 = vld [vmem:[#allocation2 + $0x2d8] sm:$0xff]
    %v165 = vld [vmem:[#allocation2 + $0x2e0] sm:$0xff]
    %v166 = vld [vmem:[#allocation2 + $0x2e8] sm:$0xff]
    %v167 = vld [vmem:[#allocation2 + $0x2f0] sm:$0xff]
    %v168 = vld [vmem:[#allocation2 + $0x2f8] sm:$0xff]
    %v169 = vld [vmem:[#allocation2 + $0x300] sm:$0xff]
    %v170 = vld [vmem:[#allocation2 + $0x308] sm:$0xff]
    %v171 = vld [vmem:[#allocation2 + $0x310] sm:$0xff]
    %v172 = vld [vmem:[#allocation2 + $0x318] sm:$0xff]
    %v173 = vld [vmem:[#allocation2 + $0x320] sm:$0xff]
    %v174 = vld [vmem:[#allocation2 + $0x328] sm:$0xff]
    %v175 = vld [vmem:[#allocation2 + $0x330] sm:$0xff]
    %v176 = vld [vmem:[#allocation2 + $0x338] sm:$0xff]
    %v177 = vld [vmem:[#allocation2 + $0x340] sm:$0xff]
    %v178 = vld [vmem:[#allocation2 + $0x348] sm:$0xff]
    %v179 = vld [vmem:[#allocation2 + $0x350] sm:$0xff]
    %v180 = vld [vmem:[#allocation2 + $0x358] sm:$0xff]
    %v181 = vld [vmem:[#allocation2 + $0x360] sm:$0xff]
    %v182 = vld [vmem:[#allocation2 + $0x368] sm:$0xff]
    %v183 = vld [vmem:[#allocation2 + $0x370] sm:$0xff]
    %v184 = vld [vmem:[#allocation2 + $0x378] sm:$0xff]
    %v185 = vld [vmem:[#allocation2 + $0x380] sm:$0xff]
    %v186 = vld [vmem:[#allocation2 + $0x388] sm:$0xff]
    %v187 = vld [vmem:[#allocation2 + $0x390] sm:$0xff]
    %v188 = vld [vmem:[#allocation2 + $0x398] sm:$0xff]
    %v189 = vld [vmem:[#allocation2 + $0x3a0] sm:$0xff]
    %v190 = vld [vmem:[#allocation2 + $0x3a8] sm:$0xff]
    %v191 = vld [vmem:[#allocation2 + $0x3b0] sm:$0xff]
    %v192 = vld [vmem:[#allocation2 + $0x3b8] sm:$0xff]
    %v193 = vld [vmem:[#allocation2 + $0x3c0] sm:$0xff]
    %v194 = vld [vmem:[#allocation2 + $0x3c8] sm:$0xff]
    %v195 = vld [vmem:[#allocation2 + $0x3d0] sm:$0xff]
    %v196 = vld [vmem:[#allocation2 + $0x3d8] sm:$0xff]
    %v197 = vld [vmem:[#allocation2 + $0x3e0] sm:$0xff]
    %v198 = vld [vmem:[#allocation2 + $0x3e8] sm:$0xff]
    %v199 = vld [vmem:[#allocation2 + $0x3f0] sm:$0xff]
    %v200 = vld [vmem:[#allocation2 + $0x3f8] sm:$0xff]
    %v201 = vld [vmem:[#allocation5] sm:$0x1]
    %v203 = vperm.slane %v201, 0
    %205 = vmatpush.msra.mxu0 %v88
    %206 = vmatpush.msra.mxu0 %v87
    %207 = vmatpush.msra.mxu0 %v86
    %208 = vmatpush.msra.mxu0 %v85
    %209 = vmatpush.msra.mxu0 %v84
    %210 = vmatpush.msra.mxu0 %v83
    %211 = vmatpush.msra.mxu0 %v82
    %212 = vmatpush.msra.mxu0 %v81
    %213 = vmatpush.msra.mxu0 %v80
    %214 = vmatpush.msra.mxu0 %v79
    %215 = vmatpush.msra.mxu0 %v78
    %216 = vmatpush.msra.mxu0 %v77
    %217 = vmatpush.msra.mxu0 %v76
    %218 = vmatpush.msra.mxu0 %v75
    %219 = vmatpush.msra.mxu0 %v74
    %220 = vmatpush.msra.mxu0 %v73
    %221 = vmatmul.f32.gmra.mxu0 %v57
    %v222 = vpop.f32.mrf.mxu0
    %v223 = vadd.f32 %v203, %v222
    %224 = vmatmul.f32.gmra.mxu0 %v65
    %v225 = vpop.f32.mrf.mxu0
    %v226 = vadd.f32 %v203, %v225
    %227 = vdwg.mxu0
    %228 = vmatpush.msra.mxu0 %v104
    %229 = vmatpush.msra.mxu0 %v103
    %230 = vmatpush.msra.mxu0 %v102
    %231 = vmatpush.msra.mxu0 %v101
    %232 = vmatpush.msra.mxu0 %v100
    %233 = vmatpush.msra.mxu0 %v99
    %234 = vmatpush.msra.mxu0 %v98
    %235 = vmatpush.msra.mxu0 %v97
    %236 = vmatpush.msra.mxu0 %v96
    %237 = vmatpush.msra.mxu0 %v95
    %238 = vmatpush.msra.mxu0 %v94
    %239 = vmatpush.msra.mxu0 %v93
    %240 = vmatpush.msra.mxu0 %v92
    %241 = vmatpush.msra.mxu0 %v91
    %242 = vmatpush.msra.mxu0 %v90
    %243 = vmatpush.msra.mxu0 %v89
    %244 = vmatmul.f32.gmra.mxu0 %v58
    %v245 = vpop.f32.mrf.mxu0
    %v246 = vadd.f32 %v223, %v245
    %247 = vmatmul.f32.gmra.mxu0 %v66
    %v248 = vpop.f32.mrf.mxu0
    %v249 = vadd.f32 %v226, %v248
    %250 = vdwg.mxu0
    %251 = vmatpush.msra.mxu0 %v120
    %252 = vmatpush.msra.mxu0 %v119
    %253 = vmatpush.msra.mxu0 %v118
    %254 = vmatpush.msra.mxu0 %v117
    %255 = vmatpush.msra.mxu0 %v116
    %256 = vmatpush.msra.mxu0 %v115
    %257 = vmatpush.msra.mxu0 %v114
    %258 = vmatpush.msra.mxu0 %v113
    %259 = vmatpush.msra.mxu0 %v112
    %260 = vmatpush.msra.mxu0 %v111
    %261 = vmatpush.msra.mxu0 %v110
    %262 = vmatpush.msra.mxu0 %v109
    %263 = vmatpush.msra.mxu0 %v108
    %264 = vmatpush.msra.mxu0 %v107
    %265 = vmatpush.msra.mxu0 %v106
    %266 = vmatpush.msra.mxu0 %v105
    %267 = vmatmul.f32.gmra.mxu0 %v59
    %v268 = vpop.f32.mrf.mxu0
    %v269 = vadd.f32 %v246, %v268
    %270 = vmatmul.f32.gmra.mxu0 %v67
    %v271 = vpop.f32.mrf.mxu0
    %v272 = vadd.f32 %v249, %v271
    %273 = vdwg.mxu0
    %274 = vmatpush.msra.mxu0 %v136
    %275 = vmatpush.msra.mxu0 %v135
    %276 = vmatpush.msra.mxu0 %v134
    %277 = vmatpush.msra.mxu0 %v133
    %278 = vmatpush.msra.mxu0 %v132
    %279 = vmatpush.msra.mxu0 %v131
    %280 = vmatpush.msra.mxu0 %v130
    %281 = vmatpush.msra.mxu0 %v129
    %282 = vmatpush.msra.mxu0 %v128
    %283 = vmatpush.msra.mxu0 %v127
    %284 = vmatpush.msra.mxu0 %v126
    %285 = vmatpush.msra.mxu0 %v125
    %286 = vmatpush.msra.mxu0 %v124
    %287 = vmatpush.msra.mxu0 %v123
    %288 = vmatpush.msra.mxu0 %v122
    %289 = vmatpush.msra.mxu0 %v121
    %290 = vmatmul.f32.gmra.mxu0 %v60
    %v291 = vpop.f32.mrf.mxu0
    %v292 = vadd.f32 %v269, %v291
    %293 = vmatmul.f32.gmra.mxu0 %v68
    %v294 = vpop.f32.mrf.mxu0
    %v295 = vadd.f32 %v272, %v294
    %296 = vdwg.mxu0
    %297 = vmatpush.msra.mxu0 %v152
    %298 = vmatpush.msra.mxu0 %v151
    %299 = vmatpush.msra.mxu0 %v150
    %300 = vmatpush.msra.mxu0 %v149
    %301 = vmatpush.msra.mxu0 %v148
    %302 = vmatpush.msra.mxu0 %v147
    %303 = vmatpush.msra.mxu0 %v146
    %304 = vmatpush.msra.mxu0 %v145
    %305 = vmatpush.msra.mxu0 %v144
    %306 = vmatpush.msra.mxu0 %v143
    %307 = vmatpush.msra.mxu0 %v142
    %308 = vmatpush.msra.mxu0 %v141
    %309 = vmatpush.msra.mxu0 %v140
    %310 = vmatpush.msra.mxu0 %v139
    %311 = vmatpush.msra.mxu0 %v138
    %312 = vmatpush.msra.mxu0 %v137
    %313 = vmatmul.f32.gmra.mxu0 %v61
    %v314 = vpop.f32.mrf.mxu0
    %v315 = vadd.f32 %v292, %v314
    %316 = vmatmul.f32.gmra.mxu0 %v69
    %v317 = vpop.f32.mrf.mxu0
    %v318 = vadd.f32 %v295, %v317
    %319 = vdwg.mxu0
    %320 = vmatpush.msra.mxu0 %v168
    %321 = vmatpush.msra.mxu0 %v167
    %322 = vmatpush.msra.mxu0 %v166
    %323 = vmatpush.msra.mxu0 %v165
    %324 = vmatpush.msra.mxu0 %v164
    %325 = vmatpush.msra.mxu0 %v163
    %326 = vmatpush.msra.mxu0 %v162
    %327 = vmatpush.msra.mxu0 %v161
    %328 = vmatpush.msra.mxu0 %v160
    %329 = vmatpush.msra.mxu0 %v159
    %330 = vmatpush.msra.mxu0 %v158
    %331 = vmatpush.msra.mxu0 %v157
    %332 = vmatpush.msra.mxu0 %v156
    %333 = vmatpush.msra.mxu0 %v155
    %334 = vmatpush.msra.mxu0 %v154
    %335 = vmatpush.msra.mxu0 %v153
    %336 = vmatmul.f32.gmra.mxu0 %v62
    %v337 = vpop.f32.mrf.mxu0
    %v338 = vadd.f32 %v315, %v337
    %339 = vmatmul.f32.gmra.mxu0 %v70
    %v340 = vpop.f32.mrf.mxu0
    %v341 = vadd.f32 %v318, %v340
    %342 = vdwg.mxu0
    %343 = vmatpush.msra.mxu0 %v184
    %344 = vmatpush.msra.mxu0 %v183
    %345 = vmatpush.msra.mxu0 %v182
    %346 = vmatpush.msra.mxu0 %v181
    %347 = vmatpush.msra.mxu0 %v180
    %348 = vmatpush.msra.mxu0 %v179
    %349 = vmatpush.msra.mxu0 %v178
    %350 = vmatpush.msra.mxu0 %v177
    %351 = vmatpush.msra.mxu0 %v176
    %352 = vmatpush.msra.mxu0 %v175
    %353 = vmatpush.msra.mxu0 %v174
    %354 = vmatpush.msra.mxu0 %v173
    %355 = vmatpush.msra.mxu0 %v172
    %356 = vmatpush.msra.mxu0 %v171
    %357 = vmatpush.msra.mxu0 %v170
    %358 = vmatpush.msra.mxu0 %v169
    %359 = vmatmul.f32.gmra.mxu0 %v63
    %v360 = vpop.f32.mrf.mxu0
    %v361 = vadd.f32 %v338, %v360
    %362 = vmatmul.f32.gmra.mxu0 %v71
    %v363 = vpop.f32.mrf.mxu0
    %v364 = vadd.f32 %v341, %v363
    %365 = vdwg.mxu0
    %366 = vmatpush.msra.mxu0 %v200
    %367 = vmatpush.msra.mxu0 %v199
    %368 = vmatpush.msra.mxu0 %v198
    %369 = vmatpush.msra.mxu0 %v197
    %370 = vmatpush.msra.mxu0 %v196
    %371 = vmatpush.msra.mxu0 %v195
    %372 = vmatpush.msra.mxu0 %v194
    %373 = vmatpush.msra.mxu0 %v193
    %374 = vmatpush.msra.mxu0 %v192
    %375 = vmatpush.msra.mxu0 %v191
    %376 = vmatpush.msra.mxu0 %v190
    %377 = vmatpush.msra.mxu0 %v189
    %378 = vmatpush.msra.mxu0 %v188
    %379 = vmatpush.msra.mxu0 %v187
    %380 = vmatpush.msra.mxu0 %v186
    %381 = vmatpush.msra.mxu0 %v185
    %382 = vmatmul.f32.gmra.mxu0 %v64
    %v383 = vpop.f32.mrf.mxu0
    %v384 = vadd.f32 %v361, %v383
    %385 = vmatmul.f32.gmra.mxu0 %v72
    %v386 = vpop.f32.mrf.mxu0
    %v387 = vadd.f32 %v364, %v386
    %388 = vdwg.mxu0
    %v389 = vmax.f32 %v384, 0.0
    %v390 = vmax.f32 %v387, 0.0
    %v391 = vld [vmem:[%s3] sm:$0xff]
    %v392 = vld [vmem:[%s3 + $0x8] sm:$0xff]
    %v393 = vld [vmem:[%s3 + $0x10] sm:$0xff]
    %v394 = vld [vmem:[%s3 + $0x18] sm:$0xff]
    %v395 = vld [vmem:[%s3 + $0x20] sm:$0xff]
    %v396 = vld [vmem:[%s3 + $0x28] sm:$0xff]
    %v397 = vld [vmem:[%s3 + $0x30] sm:$0xff]
    %v398 = vld [vmem:[%s3 + $0x38] sm:$0xff]
    %v399 = vld [vmem:[%s3 + $0x40] sm:$0xff]
    %v400 = vld [vmem:[%s3 + $0x48] sm:$0xff]
    %v401 = vld [vmem:[%s3 + $0x50] sm:$0xff]
    %v402 = vld [vmem:[%s3 + $0x58] sm:$0xff]
    %v403 = vld [vmem:[%s3 + $0x60] sm:$0xff]
    %v404 = vld [vmem:[%s3 + $0x68] sm:$0xff]
    %v405 = vld [vmem:[%s3 + $0x70] sm:$0xff]
    %v406 = vld [vmem:[%s3 + $0x78] sm:$0xff]
    %v407 = vld [vmem:[%s4] sm:$0x1]
    %v409 = vperm.slane %v407, 0
    %411 = vmatpush.msra.mxu0 %v406
    %412 = vmatpush.msra.mxu0 %v405
    %413 = vmatpush.msra.mxu0 %v404
    %414 = vmatpush.msra.mxu0 %v403
    %415 = vmatpush.msra.mxu0 %v402
    %416 = vmatpush.msra.mxu0 %v401
    %417 = vmatpush.msra.mxu0 %v400
    %418 = vmatpush.msra.mxu0 %v399
    %419 = vmatpush.msra.mxu0 %v398
    %420 = vmatpush.msra.mxu0 %v397
    %421 = vmatpush.msra.mxu0 %v396
    %422 = vmatpush.msra.mxu0 %v395
    %423 = vmatpush.msra.mxu0 %v394
    %424 = vmatpush.msra.mxu0 %v393
    %425 = vmatpush.msra.mxu0 %v392
    %426 = vmatpush.msra.mxu0 %v391
    %427 = vmatmul.f32.gmra.mxu0 %v389
    %v428 = vpop.f32.mrf.mxu0
    %v429 = vadd.f32 %v409, %v428
    %430 = vmatmul.f32.gmra.mxu0 %v390
    %v431 = vpop.f32.mrf.mxu0
    %v432 = vadd.f32 %v409, %v431
    %433 = vdwg.mxu0
    %v434 = vmax.f32 %v429, 0.0
    %v435 = vmax.f32 %v432, 0.0
    %v436 = vld [vmem:[%s5] sm:$0xff]
    %v437 = vld [vmem:[%s5 + $0x8] sm:$0xff]
    %v438 = vld [vmem:[%s5 + $0x10] sm:$0xff]
    %v439 = vld [vmem:[%s5 + $0x18] sm:$0xff]
    %v440 = vld [vmem:[%s5 + $0x20] sm:$0xff]
    %v441 = vld [vmem:[%s5 + $0x28] sm:$0xff]
    %v442 = vld [vmem:[%s5 + $0x30] sm:$0xff]
    %v443 = vld [vmem:[%s5 + $0x38] sm:$0xff]
    %v444 = vld [vmem:[%s6] sm:$0x1]
    %v446 = vperm.slane %v444, 0
    %vm448 = vcmask 523264
    %v450 = vsel %vm448, %v434, 0
    %v453 = vsel %vm448, %v435, 0
    %455 = vmatpush.msra.mxu0 0.0
    %456 = vmatpush.msra.mxu0 0.0
    %457 = vmatpush.msra.mxu0 0.0
    %458 = vmatpush.msra.mxu0 0.0
    %459 = vmatpush.msra.mxu0 0.0
    %460 = vmatpush.msra.mxu0 0.0
    %461 = vmatpush.msra.mxu0 0.0
    %462 = vmatpush.msra.mxu0 0.0
    %463 = vmatpush.msra.mxu0 %v443
    %464 = vmatpush.msra.mxu0 %v442
    %465 = vmatpush.msra.mxu0 %v441
    %466 = vmatpush.msra.mxu0 %v440
    %467 = vmatpush.msra.mxu0 %v439
    %468 = vmatpush.msra.mxu0 %v438
    %469 = vmatpush.msra.mxu0 %v437
    %470 = vmatpush.msra.mxu0 %v436
    %471 = vmatmul.f32.gmra.mxu0 %v450
    %v472 = vpop.f32.mrf.mxu0
    %v473 = vadd.f32 %v446, %v472
    %474 = vmatmul.f32.gmra.mxu0 %v453
    %v475 = vpop.f32.mrf.mxu0
    %v476 = vadd.f32 %v446, %v475
    %477 = vdwg.mxu0
    %478 = vst [vmem:[#allocation7] sm:$0xff] %v473
    %479 = vst [vmem:[#allocation7 + $0x8] sm:$0xff] %v476
    // Predicated region
    $region38: #{tpu_custom_call.1} parent=1 // pred_check
      _
    $region39: #{tpu_custom_call.1} parent=1 // pred_check_branch
      %481 = sbr.rel (0) target = $region41
    $region40: #{tpu_custom_call.1} parent=1 // pred_region
      %483 = vsyncadd [#allocation4], 0
      %s484 = sshll.u32 [#allocation7], 4
      %s485 = int_to_ptr.vmem [resolvable:$true] %s484
      %s486 = sshll.u32 %s7, 4
      %s487 = int_to_ptr.hbm [resolvable:$true] %s486
      %492 = dma.vmem_to_hbm [thread:$0]  %s485, 256, %s487, [#allocation4], 128, 128, 8
    $region41: #{tpu_custom_call.1} parent=1 // pred_fallthru
      _
    // Predicated region
    $region42: #{tpu_custom_call.1} parent=1 // pred_check
      _
    $region43: #{tpu_custom_call.1} parent=1 // pred_check_branch
      %494 = sbr.rel (0) target = $region45
    $region44: #{tpu_custom_call.1} parent=1 // pred_region
      %496 = dma.done [#allocation4], 256
    $region45: #{tpu_custom_call.1} parent=1 // pred_fallthru
      _
    %497 = vsyncpa [#allocation3], 1
    %498 = vsyncpa [#allocation6], 1
    %499 = vsyncpa [#allocation4], 1

</llo_original>
